<compile_context>
chip_gen: v7x
topology: tpu7x:2x2x1
jax: 0.10.0
libtpu: 0.0.40
codegen_flags: <defaults>
</compile_context>

<pallas_src>
import functools

import jax
import jax.numpy as jnp
from jax import lax
from jax.experimental import pallas as pl
from jax.experimental.pallas import tpu as pltpu  # noqa: F401 (TPU backend)

# ---------------------------------------------------------------------------
# In-script Darknet cfg (stand-in for parse_cfg reading a .cfg file)
# ---------------------------------------------------------------------------
CFG_STRING = """
[net]
height=16
width=16
channels=3

[convolutional]
batch_normalize=1
filters=8
size=3
stride=1
pad=1
activation=leaky

[convolutional]
batch_normalize=1
filters=16
size=3
stride=2
pad=1
activation=leaky

[convolutional]
batch_normalize=1
filters=16
size=1
stride=1
pad=1
activation=leaky

[shortcut]
from=-2
activation=linear

[convolutional]
filters=21
size=1
stride=1
pad=1
activation=linear

[yolo]
mask=0,1,2
anchors=10,13,16,30,33,23,30,61,62,45,59,119
classes=2
num=6

[route]
layers=-3

[convolutional]
batch_normalize=1
filters=8
size=1
stride=1
pad=1
activation=leaky

[upsample]
stride=2

[route]
layers=-1,-9

[convolutional]
filters=21
size=1
stride=1
pad=1
activation=linear

[yolo]
mask=3,4,5
anchors=10,13,16,30,33,23,30,61,62,45,59,119
classes=2
num=6
"""


def parse_cfg_string(cfg):
    lines = [l.strip() for l in cfg.split("\n")]
    lines = [l for l in lines if len(l) > 0 and l[0] != "#"]
    block, blocks = {}, []
    for line in lines:
        if line[0] == "[":
            if len(block) != 0:
                blocks.append(block)
                block = {}
            block["type"] = line[1:-1].strip()
        else:
            key, value = line.split("=")
            block[key.strip()] = value.strip()
    blocks.append(block)
    return blocks


# ---------------------------------------------------------------------------
# Constants / helpers
# ---------------------------------------------------------------------------
LANE = 128     # lane width: pad M (= N*Ho*Wo) to a multiple of this
K_ALIGN = 16   # pad the contraction dim for bf16 packing


def _round_up(x, m):
    return ((x + m - 1) // m) * m


# ---------------------------------------------------------------------------
# Pallas kernels
# ---------------------------------------------------------------------------
def _conv_bn_kernel(a_ref, w_ref, g_ref, b_ref, o_ref, *, m_true, leaky):
    """Fused conv(matmul) + BatchNorm(batch stats) + optional LeakyReLU.

    a: (Kp, Mp) bf16 im2col patches (zero-padded columns beyond m_true)
    w: (Cout, Kp) bf16, g/b: (Cout, 1) f32, out: (Cout, Mp) f32.
    """
    y = jnp.dot(w_ref[...], a_ref[...], preferred_element_type=jnp.float32)
    inv_m = 1.0 / m_true
    # Zero-padded M columns contribute 0 to both sums, so dividing by the true
    # count gives exact batch statistics over the real N*Ho*Wo samples.
    mean = jnp.sum(y, axis=1, keepdims=True) * inv_m
    var = jnp.sum(y * y, axis=1, keepdims=True) * inv_m - mean * mean
    var = jnp.maximum(var, 0.0)
    y = (y - mean) * lax.rsqrt(var + 1e-5) * g_ref[...] + b_ref[...]
    if leaky:
        y = jnp.maximum(y, 0.1 * y)
    o_ref[...] = y


def _conv_bias_kernel(a_ref, w_ref, b_ref, o_ref, *, leaky):
    """Fused conv(matmul) + bias + optional LeakyReLU (bn-free convs)."""
    y = jnp.dot(w_ref[...], a_ref[...], preferred_element_type=jnp.float32)
    y = y + b_ref[...]
    if leaky:
        y = jnp.maximum(y, 0.1 * y)
    o_ref[...] = y


def _add_kernel(a_ref, b_ref, o_ref):
    o_ref[...] = a_ref[...] + b_ref[...]


def _yolo_kernel(p_ref, off_ref, anch_ref, o_ref, *, stride):
    """YOLO predict_transform elementwise math on a (B, attrs, M) slab.

    attrs sits on sublanes, M = G*G*A on lanes (lane-dense). exp() is only fed
    masked inputs (rows 2,3), so no inf can leak into discarded lanes.
    """
    p = p_ref[...]                                     # (B, attrs, M)
    d = lax.broadcasted_iota(jnp.int32, p.shape, 1)    # attribute index
    sig = 1.0 / (1.0 + jnp.exp(-p))
    is_wh = jnp.logical_and(d >= 2, d < 4)
    xy = (sig + off_ref[...][None]) * stride
    wh = jnp.exp(jnp.where(is_wh, p, 0.0)) * anch_ref[...][None] * stride
    o_ref[...] = jnp.where(d < 2, xy, jnp.where(is_wh, wh, sig))


# ---------------------------------------------------------------------------
# Layer wrappers (all called inside one jax.jit)
# ---------------------------------------------------------------------------
def conv_block(x, p, ksize, stride, pad, bn, act):
    """x: (Cin, N, H, W) f32 -> (Cout, N, Ho, Wo) f32, one fused Pallas kernel."""
    Cin, N, H, W = x.shape
    w2 = p["w2"]                      # (Cout, Kp) bf16
    Cout, Kp = w2.shape
    if pad > 0:
        x = jnp.pad(x, ((0, 0), (0, 0), (pad, pad), (pad, pad)))
    Hp, Wp = H + 2 * pad, W + 2 * pad
    Ho = (Hp - ksize) // stride + 1
    Wo = (Wp - ksize) // stride + 1

    # im2col in channels-first layout: no transposes needed on either side.
    cols = []
    for kh in range(ksize):
        for kw in range(ksize):
            cols.append(
                x[:, :, kh: kh + stride * Ho: stride, kw: kw + stride * Wo: stride]
            )
    patches = jnp.stack(cols, axis=1)                    # (Cin, k*k, N, Ho, Wo)
    K = Cin * ksize * ksize
    M = N * Ho * Wo
    patches = patches.reshape(K, M)

    Mp = _round_up(M, LANE)
    patches = jnp.pad(patches, ((0, Kp - K), (0, Mp - M))).astype(jnp.bfloat16)

    leaky = act == "leaky"
    if bn:
        out = pl.pallas_call(
            functools.partial(_conv_bn_kernel, m_true=float(M), leaky=leaky),
            out_shape=jax.ShapeDtypeStruct((Cout, Mp), jnp.float32),
        )(patches, w2, p["gamma"], p["beta"])
    else:
        out = pl.pallas_call(
            functools.partial(_conv_bias_kernel, leaky=leaky),
            out_shape=jax.ShapeDtypeStruct((Cout, Mp), jnp.float32),
        )(patches, w2, p["bias"])
    return out[:, :M].reshape(Cout, N, Ho, Wo)


def shortcut_add(a, b):
    """a, b: (C, N, H, W) -> elementwise sum via a lane-dense (C, N*H*W) kernel."""
    shape = a.shape
    a2 = a.reshape(shape[0], -1)
    b2 = b.reshape(shape[0], -1)
    out = pl.pallas_call(
        _add_kernel, out_shape=jax.ShapeDtypeStruct(a2.shape, a2.dtype)
    )(a2, b2)
    return out.reshape(shape)


def upsample2x(x):
    # nn.Upsample(scale_factor=2, mode='nearest') on (C, N, H, W)
    return jnp.repeat(jnp.repeat(x, 2, axis=2), 2, axis=3)


def predict_transform(x, inp_dim, anchors, num_classes):
    """Canonical YOLOv3 predict_transform. x: (A*attrs, N, G, G) -> (N, G*G*A, attrs)."""
    C, N, G, _ = x.shape
    stride = inp_dim // G
    attrs = 5 + num_classes
    A = len(anchors)
    M = G * G * A

    # channel index c = a*attrs + t (anchor-major), output row m = gy*G*A + gx*A + a
    p = x.reshape(A, attrs, N, G, G)
    p = jnp.transpose(p, (2, 1, 3, 4, 0)).reshape(N, attrs, M)   # (B, attrs, M)

    gy, gx = jnp.meshgrid(
        jnp.arange(G, dtype=jnp.float32), jnp.arange(G, dtype=jnp.float32),
        indexing="ij",
    )
    gx_m = jnp.repeat(gx.reshape(-1), A)                         # (M,)
    gy_m = jnp.repeat(gy.reshape(-1), A)
    anchors_s = jnp.array(
        [(a0 / stride, a1 / stride) for (a0, a1) in anchors], jnp.float32
    )                                                            # (A, 2)
    aw_m = jnp.tile(anchors_s[:, 0], G * G)
    ah_m = jnp.tile(anchors_s[:, 1], G * G)

    off = jnp.zeros((attrs, M), jnp.float32).at[0, :].set(gx_m).at[1, :].set(gy_m)
    anch = jnp.zeros((attrs, M), jnp.float32).at[2, :].set(aw_m).at[3, :].set(ah_m)

    out = pl.pallas_call(
        functools.partial(_yolo_kernel, stride=float(stride)),
        out_shape=jax.ShapeDtypeStruct((N, attrs, M), jnp.float32),
    )(p, off, anch)
    return jnp.transpose(out, (0, 2, 1))                         # (B, M, attrs)


# ---------------------------------------------------------------------------
# Darknet (Pallas version)
# ---------------------------------------------------------------------------
class DarknetPallas:
    def __init__(self, blocks, key):
        self.blocks = blocks
        self.net_info = blocks[0]
        self.params = []
        prev_filters = int(self.net_info.get("channels", 3))
        output_filters = []
        for index, b in enumerate(blocks[1:]):
            p = {}
            if b["type"] == "convolutional":
                bn = int(b.get("batch_normalize", 0))
                filters = int(b["filters"])
                ksize = int(b["size"])
                key, k1, k2, k3, k4 = jax.random.split(key, 5)
                w = (
                    jax.random.normal(
                        k1, (filters, prev_filters, ksize, ksize), jnp.float32
                    )
                    * 0.1
                )
                K = prev_filters * ksize * ksize
                Kp = _round_up(K, K_ALIGN)
                w2 = w.reshape(filters, K)
                w2 = jnp.pad(w2, ((0, 0), (0, Kp - K))).astype(jnp.bfloat16)
                p["w2"] = w2                                     # (Cout, Kp) bf16
                if bn:
                    p["gamma"] = (
                        1.0 + 0.1 * jax.random.normal(k2, (filters,), jnp.float32)
                    ).reshape(filters, 1)
                    p["beta"] = (
                        0.1 * jax.random.normal(k3, (filters,), jnp.float32)
                    ).reshape(filters, 1)
                    # conv bias is False when batch_normalize=1 (matches PyTorch cfg)
                else:
                    p["bias"] = (
                        0.1 * jax.random.normal(k4, (filters,), jnp.float32)
                    ).reshape(filters, 1)
                prev_filters = filters
            elif b["type"] == "route":
                layers = [int(a) for a in b["layers"].split(",")]
                start = layers[0]
                end = layers[1] if len(layers) > 1 else 0
                if start > 0:
                    start -= index
                if end > 0:
                    end -= index
                if end < 0:
                    prev_filters = output_filters[index + start] + output_filters[index + end]
                else:
                    prev_filters = output_filters[index + start]
            # shortcut / upsample / yolo: channel count unchanged
            output_filters.append(prev_filters)
            self.params.append(p)
        self._fwd = jax.jit(self._forward)

    def forward(self, x):
        return self._fwd(self.params, x)

    def _forward(self, params, x_nchw):
        # Internal layout: channels-first slab (C, N, H, W); one transpose at entry.
        x = jnp.transpose(x_nchw, (1, 0, 2, 3))
        modules = self.blocks[1:]
        outputs = {}
        detections = None
        for i, module in enumerate(modules):
            mtype = module["type"]
            if mtype == "convolutional":
                ksize = int(module["size"])
                stride = int(module["stride"])
                pad = (ksize - 1) // 2 if int(module["pad"]) else 0
                bn = int(module.get("batch_normalize", 0))
                act = module["activation"]
                x = conv_block(x, params[i], ksize, stride, pad, bn, act)
            elif mtype == "upsample":
                x = upsample2x(x)
            elif mtype == "route":
                layers = [int(a) for a in module["layers"].split(",")]
                if layers[0] > 0:
                    layers[0] -= i
                if len(layers) == 1:
                    x = outputs[i + layers[0]]
                else:
                    if layers[1] > 0:
                        layers[1] -= i
                    # channel concat is axis 0 in (C, N, H, W)
                    x = jnp.concatenate(
                        [outputs[i + layers[0]], outputs[i + layers[1]]], axis=0
                    )
            elif mtype == "shortcut":
                frm = int(module["from"])
                x = shortcut_add(outputs[i - 1], outputs[i + frm])
            elif mtype == "yolo":
                mask = [int(m) for m in module["mask"].split(",")]
                anchors = [int(a) for a in module["anchors"].split(",")]
                anchors = [(anchors[j], anchors[j + 1]) for j in range(0, len(anchors), 2)]
                anchors = [anchors[m] for m in mask]
                inp_dim = int(self.net_info["height"])
                num_classes = int(module["classes"])
                x = predict_transform(x, inp_dim, anchors, num_classes)
                if detections is None:
                    detections = x
                else:
                    detections = jnp.concatenate([detections, x], axis=1)
            outputs[i] = x
        return detections


# ---------------------------------------------------------------------------
if __name__ == "__main__":
    blocks = parse_cfg_string(CFG_STRING)
    key = jax.random.PRNGKey(0)
    key, xkey = jax.random.split(key)
    net = DarknetPallas(blocks, key)

    x = jax.random.normal(xkey, (2, 3, 16, 16), jnp.float32)  # NCHW, like PyTorch
    det = net.forward(x)
    det = jax.block_until_ready(det)

    # two YOLO heads: 8x8 grid (3 anchors) + 16x16 grid (3 anchors), 5+2 attrs
    assert det.shape == (2, 8 * 8 * 3 + 16 * 16 * 3, 7), det.shape
    assert bool(jnp.all(jnp.isfinite(det)))
    print("KERNEL_OK")
</pallas_src>

<mosaic_0001>
module attributes {stable_mosaic.version = 11 : i64} {
  func.func @_conv_bn_kernel(%arg0: memref<32x512xbf16, #tpu.memory_space<vmem>>, %arg1: memref<8x32xbf16, #tpu.memory_space<vmem>>, %arg2: memref<8x1xf32, #tpu.memory_space<vmem>>, %arg3: memref<8x1xf32, #tpu.memory_space<vmem>>, %arg4: memref<8x512xf32, #tpu.memory_space<vmem>>) attributes {dimension_semantics = [], scalar_prefetch = 0 : i64, scratch_operands = 0 : i64, tpu.core_type = #tpu.core_type<tc>} {
    %c0 = arith.constant 0 : index
    %c0_0 = arith.constant 0 : index
    %0 = vector.load %arg1[%c0, %c0_0] : memref<8x32xbf16, #tpu.memory_space<vmem>>, vector<8x32xbf16>
    %c0_1 = arith.constant 0 : index
    %c0_2 = arith.constant 0 : index
    %1 = vector.load %arg0[%c0_1, %c0_2] : memref<32x512xbf16, #tpu.memory_space<vmem>>, vector<32x512xbf16>
    %cst = arith.constant dense<0.000000e+00> : vector<8x512xf32>
    %2 = tpu.matmul %0, %1, %cst {dimension_numbers = #tpu.dot_dimension_numbers<[1], [0], [0], [1], [0, 0, 1, 1], [], []>} : vector<8x32xbf16>, vector<32x512xbf16>, vector<8x512xf32> -> vector<8x512xf32>
    %cst_3 = arith.constant dense<0.000000e+00> : vector<8xf32>
    %3 = vector.multi_reduction <add>, %2, %cst_3 [1] : vector<8x512xf32> to vector<8xf32>
    %4 = vector.shape_cast %3 : vector<8xf32> to vector<8x1xf32>
    %cst_4 = arith.constant 0.001953125 : f32
    %5 = vector.broadcast %cst_4 : f32 to vector<8x1xf32>
    %6 = arith.mulf %4, %5 : vector<8x1xf32>
    %7 = arith.mulf %2, %2 : vector<8x512xf32>
    %cst_5 = arith.constant dense<0.000000e+00> : vector<8xf32>
    %8 = vector.multi_reduction <add>, %7, %cst_5 [1] : vector<8x512xf32> to vector<8xf32>
    %9 = vector.shape_cast %8 : vector<8xf32> to vector<8x1xf32>
    %cst_6 = arith.constant 0.001953125 : f32
    %10 = vector.broadcast %cst_6 : f32 to vector<8x1xf32>
    %11 = arith.mulf %9, %10 : vector<8x1xf32>
    %12 = arith.mulf %6, %6 : vector<8x1xf32>
    %13 = arith.subf %11, %12 : vector<8x1xf32>
    %cst_7 = arith.constant 0.000000e+00 : f32
    %14 = vector.broadcast %cst_7 : f32 to vector<8x1xf32>
    %15 = arith.maximumf %13, %14 : vector<8x1xf32>
    %16 = vector.broadcast %6 : vector<8x1xf32> to vector<8x512xf32>
    %17 = arith.subf %2, %16 : vector<8x512xf32>
    %cst_8 = arith.constant 9.99999974E-6 : f32
    %18 = vector.broadcast %cst_8 : f32 to vector<8x1xf32>
    %19 = arith.addf %15, %18 : vector<8x1xf32>
    %20 = math.rsqrt %19 : vector<8x1xf32>
    %21 = vector.broadcast %20 : vector<8x1xf32> to vector<8x512xf32>
    %22 = arith.mulf %17, %21 : vector<8x512xf32>
    %c0_9 = arith.constant 0 : index
    %c0_10 = arith.constant 0 : index
    %23 = vector.load %arg2[%c0_9, %c0_10] : memref<8x1xf32, #tpu.memory_space<vmem>>, vector<8x1xf32>
    %24 = vector.broadcast %23 : vector<8x1xf32> to vector<8x512xf32>
    %25 = arith.mulf %22, %24 : vector<8x512xf32>
    %c0_11 = arith.constant 0 : index
    %c0_12 = arith.constant 0 : index
    %26 = vector.load %arg3[%c0_11, %c0_12] : memref<8x1xf32, #tpu.memory_space<vmem>>, vector<8x1xf32>
    %27 = vector.broadcast %26 : vector<8x1xf32> to vector<8x512xf32>
    %28 = arith.addf %25, %27 : vector<8x512xf32>
    %cst_13 = arith.constant 1.000000e-01 : f32
    %29 = vector.broadcast %cst_13 : f32 to vector<8x512xf32>
    %30 = arith.mulf %29, %28 : vector<8x512xf32>
    %31 = arith.maximumf %28, %30 : vector<8x512xf32>
    %c0_14 = arith.constant 0 : index
    %c0_15 = arith.constant 0 : index
    %32 = vector.load %arg4[%c0_14, %c0_15] : memref<8x512xf32, #tpu.memory_space<vmem>>, vector<8x512xf32>
    tpu.vector_store %arg4[%c0_14, %c0_15], %31 {strides = array<i32>} : memref<8x512xf32, #tpu.memory_space<vmem>>, vector<8x512xf32>,
    return
  }
}

module attributes {stable_mosaic.version = 11 : i64} {
  func.func @_conv_bn_kernel(%arg0: memref<16x128xbf16, #tpu.memory_space<vmem>>, %arg1: memref<16x16xbf16, #tpu.memory_space<vmem>>, %arg2: memref<16x1xf32, #tpu.memory_space<vmem>>, %arg3: memref<16x1xf32, #tpu.memory_space<vmem>>, %arg4: memref<16x128xf32, #tpu.memory_space<vmem>>) attributes {dimension_semantics = [], scalar_prefetch = 0 : i64, scratch_operands = 0 : i64, tpu.core_type = #tpu.core_type<tc>} {
    %c0 = arith.constant 0 : index
    %c0_0 = arith.constant 0 : index
    %0 = vector.load %arg1[%c0, %c0_0] : memref<16x16xbf16, #tpu.memory_space<vmem>>, vector<16x16xbf16>
    %c0_1 = arith.constant 0 : index
    %c0_2 = arith.constant 0 : index
    %1 = vector.load %arg0[%c0_1, %c0_2] : memref<16x128xbf16, #tpu.memory_space<vmem>>, vector<16x128xbf16>
    %cst = arith.constant dense<0.000000e+00> : vector<16x128xf32>
    %2 = tpu.matmul %0, %1, %cst {dimension_numbers = #tpu.dot_dimension_numbers<[1], [0], [0], [1], [0, 0, 1, 1], [], []>} : vector<16x16xbf16>, vector<16x128xbf16>, vector<16x128xf32> -> vector<16x128xf32>
    %cst_3 = arith.constant dense<0.000000e+00> : vector<16xf32>
    %3 = vector.multi_reduction <add>, %2, %cst_3 [1] : vector<16x128xf32> to vector<16xf32>
    %4 = vector.shape_cast %3 : vector<16xf32> to vector<16x1xf32>
    %cst_4 = arith.constant 7.812500e-03 : f32
    %5 = vector.broadcast %cst_4 : f32 to vector<16x1xf32>
    %6 = arith.mulf %4, %5 : vector<16x1xf32>
    %7 = arith.mulf %2, %2 : vector<16x128xf32>
    %cst_5 = arith.constant dense<0.000000e+00> : vector<16xf32>
    %8 = vector.multi_reduction <add>, %7, %cst_5 [1] : vector<16x128xf32> to vector<16xf32>
    %9 = vector.shape_cast %8 : vector<16xf32> to vector<16x1xf32>
    %cst_6 = arith.constant 7.812500e-03 : f32
    %10 = vector.broadcast %cst_6 : f32 to vector<16x1xf32>
    %11 = arith.mulf %9, %10 : vector<16x1xf32>
    %12 = arith.mulf %6, %6 : vector<16x1xf32>
    %13 = arith.subf %11, %12 : vector<16x1xf32>
    %cst_7 = arith.constant 0.000000e+00 : f32
    %14 = vector.broadcast %cst_7 : f32 to vector<16x1xf32>
    %15 = arith.maximumf %13, %14 : vector<16x1xf32>
    %16 = vector.broadcast %6 : vector<16x1xf32> to vector<16x128xf32>
    %17 = arith.subf %2, %16 : vector<16x128xf32>
    %cst_8 = arith.constant 9.99999974E-6 : f32
    %18 = vector.broadcast %cst_8 : f32 to vector<16x1xf32>
    %19 = arith.addf %15, %18 : vector<16x1xf32>
    %20 = math.rsqrt %19 : vector<16x1xf32>
    %21 = vector.broadcast %20 : vector<16x1xf32> to vector<16x128xf32>
    %22 = arith.mulf %17, %21 : vector<16x128xf32>
    %c0_9 = arith.constant 0 : index
    %c0_10 = arith.constant 0 : index
    %23 = vector.load %arg2[%c0_9, %c0_10] : memref<16x1xf32, #tpu.memory_space<vmem>>, vector<16x1xf32>
    %24 = vector.broadcast %23 : vector<16x1xf32> to vector<16x128xf32>
    %25 = arith.mulf %22, %24 : vector<16x128xf32>
    %c0_11 = arith.constant 0 : index
    %c0_12 = arith.constant 0 : index
    %26 = vector.load %arg3[%c0_11, %c0_12] : memref<16x1xf32, #tpu.memory_space<vmem>>, vector<16x1xf32>
    %27 = vector.broadcast %26 : vector<16x1xf32> to vector<16x128xf32>
    %28 = arith.addf %25, %27 : vector<16x128xf32>
    %cst_13 = arith.constant 1.000000e-01 : f32
    %29 = vector.broadcast %cst_13 : f32 to vector<16x128xf32>
    %30 = arith.mulf %29, %28 : vector<16x128xf32>
    %31 = arith.maximumf %28, %30 : vector<16x128xf32>
    %c0_14 = arith.constant 0 : index
    %c0_15 = arith.constant 0 : index
    %32 = vector.load %arg4[%c0_14, %c0_15] : memref<16x128xf32, #tpu.memory_space<vmem>>, vector<16x128xf32>
    tpu.vector_store %arg4[%c0_14, %c0_15], %31 {strides = array<i32>} : memref<16x128xf32, #tpu.memory_space<vmem>>, vector<16x128xf32>,
    return
  }
}

module attributes {stable_mosaic.version = 11 : i64} {
  func.func @_conv_bn_kernel(%arg0: memref<80x128xbf16, #tpu.memory_space<vmem>>, %arg1: memref<16x80xbf16, #tpu.memory_space<vmem>>, %arg2: memref<16x1xf32, #tpu.memory_space<vmem>>, %arg3: memref<16x1xf32, #tpu.memory_space<vmem>>, %arg4: memref<16x128xf32, #tpu.memory_space<vmem>>) attributes {dimension_semantics = [], scalar_prefetch = 0 : i64, scratch_operands = 0 : i64, tpu.core_type = #tpu.core_type<tc>} {
    %c0 = arith.constant 0 : index
    %c0_0 = arith.constant 0 : index
    %0 = vector.load %arg1[%c0, %c0_0] : memref<16x80xbf16, #tpu.memory_space<vmem>>, vector<16x80xbf16>
    %c0_1 = arith.constant 0 : index
    %c0_2 = arith.constant 0 : index
    %1 = vector.load %arg0[%c0_1, %c0_2] : memref<80x128xbf16, #tpu.memory_space<vmem>>, vector<80x128xbf16>
    %cst = arith.constant dense<0.000000e+00> : vector<16x128xf32>
    %2 = tpu.matmul %0, %1, %cst {dimension_numbers = #tpu.dot_dimension_numbers<[1], [0], [0], [1], [0, 0, 1, 1], [], []>} : vector<16x80xbf16>, vector<80x128xbf16>, vector<16x128xf32> -> vector<16x128xf32>
    %cst_3 = arith.constant dense<0.000000e+00> : vector<16xf32>
    %3 = vector.multi_reduction <add>, %2, %cst_3 [1] : vector<16x128xf32> to vector<16xf32>
    %4 = vector.shape_cast %3 : vector<16xf32> to vector<16x1xf32>
    %cst_4 = arith.constant 7.812500e-03 : f32
    %5 = vector.broadcast %cst_4 : f32 to vector<16x1xf32>
    %6 = arith.mulf %4, %5 : vector<16x1xf32>
    %7 = arith.mulf %2, %2 : vector<16x128xf32>
    %cst_5 = arith.constant dense<0.000000e+00> : vector<16xf32>
    %8 = vector.multi_reduction <add>, %7, %cst_5 [1] : vector<16x128xf32> to vector<16xf32>
    %9 = vector.shape_cast %8 : vector<16xf32> to vector<16x1xf32>
    %cst_6 = arith.constant 7.812500e-03 : f32
    %10 = vector.broadcast %cst_6 : f32 to vector<16x1xf32>
    %11 = arith.mulf %9, %10 : vector<16x1xf32>
    %12 = arith.mulf %6, %6 : vector<16x1xf32>
    %13 = arith.subf %11, %12 : vector<16x1xf32>
    %cst_7 = arith.constant 0.000000e+00 : f32
    %14 = vector.broadcast %cst_7 : f32 to vector<16x1xf32>
    %15 = arith.maximumf %13, %14 : vector<16x1xf32>
    %16 = vector.broadcast %6 : vector<16x1xf32> to vector<16x128xf32>
    %17 = arith.subf %2, %16 : vector<16x128xf32>
    %cst_8 = arith.constant 9.99999974E-6 : f32
    %18 = vector.broadcast %cst_8 : f32 to vector<16x1xf32>
    %19 = arith.addf %15, %18 : vector<16x1xf32>
    %20 = math.rsqrt %19 : vector<16x1xf32>
    %21 = vector.broadcast %20 : vector<16x1xf32> to vector<16x128xf32>
    %22 = arith.mulf %17, %21 : vector<16x128xf32>
    %c0_9 = arith.constant 0 : index
    %c0_10 = arith.constant 0 : index
    %23 = vector.load %arg2[%c0_9, %c0_10] : memref<16x1xf32, #tpu.memory_space<vmem>>, vector<16x1xf32>
    %24 = vector.broadcast %23 : vector<16x1xf32> to vector<16x128xf32>
    %25 = arith.mulf %22, %24 : vector<16x128xf32>
    %c0_11 = arith.constant 0 : index
    %c0_12 = arith.constant 0 : index
    %26 = vector.load %arg3[%c0_11, %c0_12] : memref<16x1xf32, #tpu.memory_space<vmem>>, vector<16x1xf32>
    %27 = vector.broadcast %26 : vector<16x1xf32> to vector<16x128xf32>
    %28 = arith.addf %25, %27 : vector<16x128xf32>
    %cst_13 = arith.constant 1.000000e-01 : f32
    %29 = vector.broadcast %cst_13 : f32 to vector<16x128xf32>
    %30 = arith.mulf %29, %28 : vector<16x128xf32>
    %31 = arith.maximumf %28, %30 : vector<16x128xf32>
    %c0_14 = arith.constant 0 : index
    %c0_15 = arith.constant 0 : index
    %32 = vector.load %arg4[%c0_14, %c0_15] : memref<16x128xf32, #tpu.memory_space<vmem>>, vector<16x128xf32>
    tpu.vector_store %arg4[%c0_14, %c0_15], %31 {strides = array<i32>} : memref<16x128xf32, #tpu.memory_space<vmem>>, vector<16x128xf32>,
    return
  }
}

module attributes {stable_mosaic.version = 11 : i64} {
  func.func @_add_kernel(%arg0: memref<16x128xf32, #tpu.memory_space<vmem>>, %arg1: memref<16x128xf32, #tpu.memory_space<vmem>>, %arg2: memref<16x128xf32, #tpu.memory_space<vmem>>) attributes {dimension_semantics = [], scalar_prefetch = 0 : i64, scratch_operands = 0 : i64, tpu.core_type = #tpu.core_type<tc>} {
    %c0 = arith.constant 0 : index
    %c0_0 = arith.constant 0 : index
    %0 = vector.load %arg0[%c0, %c0_0] : memref<16x128xf32, #tpu.memory_space<vmem>>, vector<16x128xf32>
    %c0_1 = arith.constant 0 : index
    %c0_2 = arith.constant 0 : index
    %1 = vector.load %arg1[%c0_1, %c0_2] : memref<16x128xf32, #tpu.memory_space<vmem>>, vector<16x128xf32>
    %2 = arith.addf %0, %1 : vector<16x128xf32>
    %c0_3 = arith.constant 0 : index
    %c0_4 = arith.constant 0 : index
    %3 = vector.load %arg2[%c0_3, %c0_4] : memref<16x128xf32, #tpu.memory_space<vmem>>, vector<16x128xf32>
    tpu.vector_store %arg2[%c0_3, %c0_4], %2 {strides = array<i32>} : memref<16x128xf32, #tpu.memory_space<vmem>>, vector<16x128xf32>,
    return
  }
}

module attributes {stable_mosaic.version = 11 : i64} {
  func.func @_conv_bn_kernel(%arg0: memref<16x128xbf16, #tpu.memory_space<vmem>>, %arg1: memref<8x16xbf16, #tpu.memory_space<vmem>>, %arg2: memref<8x1xf32, #tpu.memory_space<vmem>>, %arg3: memref<8x1xf32, #tpu.memory_space<vmem>>, %arg4: memref<8x128xf32, #tpu.memory_space<vmem>>) attributes {dimension_semantics = [], scalar_prefetch = 0 : i64, scratch_operands = 0 : i64, tpu.core_type = #tpu.core_type<tc>} {
    %c0 = arith.constant 0 : index
    %c0_0 = arith.constant 0 : index
    %0 = vector.load %arg1[%c0, %c0_0] : memref<8x16xbf16, #tpu.memory_space<vmem>>, vector<8x16xbf16>
    %c0_1 = arith.constant 0 : index
    %c0_2 = arith.constant 0 : index
    %1 = vector.load %arg0[%c0_1, %c0_2] : memref<16x128xbf16, #tpu.memory_space<vmem>>, vector<16x128xbf16>
    %cst = arith.constant dense<0.000000e+00> : vector<8x128xf32>
    %2 = tpu.matmul %0, %1, %cst {dimension_numbers = #tpu.dot_dimension_numbers<[1], [0], [0], [1], [0, 0, 1, 1], [], []>} : vector<8x16xbf16>, vector<16x128xbf16>, vector<8x128xf32> -> vector<8x128xf32>
    %cst_3 = arith.constant dense<0.000000e+00> : vector<8xf32>
    %3 = vector.multi_reduction <add>, %2, %cst_3 [1] : vector<8x128xf32> to vector<8xf32>
    %4 = vector.shape_cast %3 : vector<8xf32> to vector<8x1xf32>
    %cst_4 = arith.constant 7.812500e-03 : f32
    %5 = vector.broadcast %cst_4 : f32 to vector<8x1xf32>
    %6 = arith.mulf %4, %5 : vector<8x1xf32>
    %7 = arith.mulf %2, %2 : vector<8x128xf32>
    %cst_5 = arith.constant dense<0.000000e+00> : vector<8xf32>
    %8 = vector.multi_reduction <add>, %7, %cst_5 [1] : vector<8x128xf32> to vector<8xf32>
    %9 = vector.shape_cast %8 : vector<8xf32> to vector<8x1xf32>
    %cst_6 = arith.constant 7.812500e-03 : f32
    %10 = vector.broadcast %cst_6 : f32 to vector<8x1xf32>
    %11 = arith.mulf %9, %10 : vector<8x1xf32>
    %12 = arith.mulf %6, %6 : vector<8x1xf32>
    %13 = arith.subf %11, %12 : vector<8x1xf32>
    %cst_7 = arith.constant 0.000000e+00 : f32
    %14 = vector.broadcast %cst_7 : f32 to vector<8x1xf32>
    %15 = arith.maximumf %13, %14 : vector<8x1xf32>
    %16 = vector.broadcast %6 : vector<8x1xf32> to vector<8x128xf32>
    %17 = arith.subf %2, %16 : vector<8x128xf32>
    %cst_8 = arith.constant 9.99999974E-6 : f32
    %18 = vector.broadcast %cst_8 : f32 to vector<8x1xf32>
    %19 = arith.addf %15, %18 : vector<8x1xf32>
    %20 = math.rsqrt %19 : vector<8x1xf32>
    %21 = vector.broadcast %20 : vector<8x1xf32> to vector<8x128xf32>
    %22 = arith.mulf %17, %21 : vector<8x128xf32>
    %c0_9 = arith.constant 0 : index
    %c0_10 = arith.constant 0 : index
    %23 = vector.load %arg2[%c0_9, %c0_10] : memref<8x1xf32, #tpu.memory_space<vmem>>, vector<8x1xf32>
    %24 = vector.broadcast %23 : vector<8x1xf32> to vector<8x128xf32>
    %25 = arith.mulf %22, %24 : vector<8x128xf32>
    %c0_11 = arith.constant 0 : index
    %c0_12 = arith.constant 0 : index
    %26 = vector.load %arg3[%c0_11, %c0_12] : memref<8x1xf32, #tpu.memory_space<vmem>>, vector<8x1xf32>
    %27 = vector.broadcast %26 : vector<8x1xf32> to vector<8x128xf32>
    %28 = arith.addf %25, %27 : vector<8x128xf32>
    %cst_13 = arith.constant 1.000000e-01 : f32
    %29 = vector.broadcast %cst_13 : f32 to vector<8x128xf32>
    %30 = arith.mulf %29, %28 : vector<8x128xf32>
    %31 = arith.maximumf %28, %30 : vector<8x128xf32>
    %c0_14 = arith.constant 0 : index
    %c0_15 = arith.constant 0 : index
    %32 = vector.load %arg4[%c0_14, %c0_15] : memref<8x128xf32, #tpu.memory_space<vmem>>, vector<8x128xf32>
    tpu.vector_store %arg4[%c0_14, %c0_15], %31 {strides = array<i32>} : memref<8x128xf32, #tpu.memory_space<vmem>>, vector<8x128xf32>,
    return
  }
}

module attributes {stable_mosaic.version = 11 : i64} {
  func.func @_conv_bias_kernel(%arg0: memref<16x512xbf16, #tpu.memory_space<vmem>>, %arg1: memref<21x16xbf16, #tpu.memory_space<vmem>>, %arg2: memref<21x1xf32, #tpu.memory_space<vmem>>, %arg3: memref<21x512xf32, #tpu.memory_space<vmem>>) attributes {dimension_semantics = [], scalar_prefetch = 0 : i64, scratch_operands = 0 : i64, tpu.core_type = #tpu.core_type<tc>} {
    %c0 = arith.constant 0 : index
    %c0_0 = arith.constant 0 : index
    %0 = vector.load %arg1[%c0, %c0_0] : memref<21x16xbf16, #tpu.memory_space<vmem>>, vector<21x16xbf16>
    %c0_1 = arith.constant 0 : index
    %c0_2 = arith.constant 0 : index
    %1 = vector.load %arg0[%c0_1, %c0_2] : memref<16x512xbf16, #tpu.memory_space<vmem>>, vector<16x512xbf16>
    %cst = arith.constant dense<0.000000e+00> : vector<21x512xf32>
    %2 = tpu.matmul %0, %1, %cst {dimension_numbers = #tpu.dot_dimension_numbers<[1], [0], [0], [1], [0, 0, 1, 1], [], []>} : vector<21x16xbf16>, vector<16x512xbf16>, vector<21x512xf32> -> vector<21x512xf32>
    %c0_3 = arith.constant 0 : index
    %c0_4 = arith.constant 0 : index
    %3 = vector.load %arg2[%c0_3, %c0_4] : memref<21x1xf32, #tpu.memory_space<vmem>>, vector<21x1xf32>
    %4 = vector.broadcast %3 : vector<21x1xf32> to vector<21x512xf32>
    %5 = arith.addf %2, %4 : vector<21x512xf32>
    %c0_5 = arith.constant 0 : index
    %c0_6 = arith.constant 0 : index
    %6 = vector.load %arg3[%c0_5, %c0_6] : memref<21x512xf32, #tpu.memory_space<vmem>>, vector<21x512xf32>
    tpu.vector_store %arg3[%c0_5, %c0_6], %5 {strides = array<i32>} : memref<21x512xf32, #tpu.memory_space<vmem>>, vector<21x512xf32>,
    return
  }
}

module attributes {stable_mosaic.version = 11 : i64} {
  func.func @_yolo_kernel(%arg0: memref<2x7x768xf32, #tpu.memory_space<vmem>>, %arg1: memref<7x768xf32, #tpu.memory_space<vmem>>, %arg2: memref<7x768xf32, #tpu.memory_space<vmem>>, %arg3: memref<2x7x768xf32, #tpu.memory_space<vmem>>) attributes {dimension_semantics = [], scalar_prefetch = 0 : i64, scratch_operands = 0 : i64, tpu.core_type = #tpu.core_type<tc>} {
    %c0 = arith.constant 0 : index
    %c0_0 = arith.constant 0 : index
    %c0_1 = arith.constant 0 : index
    %0 = vector.load %arg0[%c0, %c0_0, %c0_1] : memref<2x7x768xf32, #tpu.memory_space<vmem>>, vector<2x7x768xf32>
    %1 = tpu.iota {dimensions = array<i32: 1>} : vector<2x7x768xi32>
    %cst = arith.constant 0.000000e+00 : f32
    %2 = vector.broadcast %cst : f32 to vector<2x7x768xf32>
    %3 = arith.subf %2, %0 : vector<2x7x768xf32>
    %4 = math.exp %3 : vector<2x7x768xf32>
    %cst_2 = arith.constant 1.000000e+00 : f32
    %5 = vector.broadcast %cst_2 : f32 to vector<2x7x768xf32>
    %6 = arith.addf %5, %4 : vector<2x7x768xf32>
    %cst_3 = arith.constant 1.000000e+00 : f32
    %7 = vector.broadcast %cst_3 : f32 to vector<2x7x768xf32>
    %8 = arith.divf %7, %6 : vector<2x7x768xf32>
    %c2_i32 = arith.constant 2 : i32
    %9 = vector.broadcast %c2_i32 : i32 to vector<2x7x768xi32>
    %10 = arith.cmpi sge, %1, %9 : vector<2x7x768xi32>
    %c4_i32 = arith.constant 4 : i32
    %11 = vector.broadcast %c4_i32 : i32 to vector<2x7x768xi32>
    %12 = arith.cmpi slt, %1, %11 : vector<2x7x768xi32>
    %13 = arith.andi %10, %12 : vector<2x7x768xi1>
    %c0_4 = arith.constant 0 : index
    %c0_5 = arith.constant 0 : index
    %14 = vector.load %arg1[%c0_4, %c0_5] : memref<7x768xf32, #tpu.memory_space<vmem>>, vector<7x768xf32>
    %15 = vector.shape_cast %14 : vector<7x768xf32> to vector<1x7x768xf32>
    %16 = vector.broadcast %15 : vector<1x7x768xf32> to vector<2x7x768xf32>
    %17 = arith.addf %8, %16 : vector<2x7x768xf32>
    %cst_6 = arith.constant 1.000000e+00 : f32
    %18 = vector.broadcast %cst_6 : f32 to vector<2x7x768xf32>
    %19 = arith.mulf %17, %18 : vector<2x7x768xf32>
    %cst_7 = arith.constant 0.000000e+00 : f32
    %20 = vector.broadcast %cst_7 : f32 to vector<2x7x768xf32>
    %21 = arith.select %13, %0, %20 : vector<2x7x768xi1>, vector<2x7x768xf32>
    %22 = math.exp %21 : vector<2x7x768xf32>
    %c0_8 = arith.constant 0 : index
    %c0_9 = arith.constant 0 : index
    %23 = vector.load %arg2[%c0_8, %c0_9] : memref<7x768xf32, #tpu.memory_space<vmem>>, vector<7x768xf32>
    %24 = vector.shape_cast %23 : vector<7x768xf32> to vector<1x7x768xf32>
    %25 = vector.broadcast %24 : vector<1x7x768xf32> to vector<2x7x768xf32>
    %26 = arith.mulf %22, %25 : vector<2x7x768xf32>
    %cst_10 = arith.constant 1.000000e+00 : f32
    %27 = vector.broadcast %cst_10 : f32 to vector<2x7x768xf32>
    %28 = arith.mulf %26, %27 : vector<2x7x768xf32>
    %c2_i32_11 = arith.constant 2 : i32
    %29 = vector.broadcast %c2_i32_11 : i32 to vector<2x7x768xi32>
    %30 = arith.cmpi slt, %1, %29 : vector<2x7x768xi32>
    %31 = arith.select %13, %28, %8 : vector<2x7x768xi1>, vector<2x7x768xf32>
    %32 = arith.select %30, %19, %31 : vector<2x7x768xi1>, vector<2x7x768xf32>
    %c0_12 = arith.constant 0 : index
    %c0_13 = arith.constant 0 : index
    %c0_14 = arith.constant 0 : index
    %33 = vector.load %arg3[%c0_12, %c0_13, %c0_14] : memref<2x7x768xf32, #tpu.memory_space<vmem>>, vector<2x7x768xf32>
    tpu.vector_store %arg3[%c0_12, %c0_13, %c0_14], %32 {strides = array<i32>} : memref<2x7x768xf32, #tpu.memory_space<vmem>>, vector<2x7x768xf32>,
    return
  }
}

module attributes {stable_mosaic.version = 11 : i64} {
  func.func @_conv_bias_kernel(%arg0: memref<16x128xbf16, #tpu.memory_space<vmem>>, %arg1: memref<21x16xbf16, #tpu.memory_space<vmem>>, %arg2: memref<21x1xf32, #tpu.memory_space<vmem>>, %arg3: memref<21x128xf32, #tpu.memory_space<vmem>>) attributes {dimension_semantics = [], scalar_prefetch = 0 : i64, scratch_operands = 0 : i64, tpu.core_type = #tpu.core_type<tc>} {
    %c0 = arith.constant 0 : index
    %c0_0 = arith.constant 0 : index
    %0 = vector.load %arg1[%c0, %c0_0] : memref<21x16xbf16, #tpu.memory_space<vmem>>, vector<21x16xbf16>
    %c0_1 = arith.constant 0 : index
    %c0_2 = arith.constant 0 : index
    %1 = vector.load %arg0[%c0_1, %c0_2] : memref<16x128xbf16, #tpu.memory_space<vmem>>, vector<16x128xbf16>
    %cst = arith.constant dense<0.000000e+00> : vector<21x128xf32>
    %2 = tpu.matmul %0, %1, %cst {dimension_numbers = #tpu.dot_dimension_numbers<[1], [0], [0], [1], [0, 0, 1, 1], [], []>} : vector<21x16xbf16>, vector<16x128xbf16>, vector<21x128xf32> -> vector<21x128xf32>
    %c0_3 = arith.constant 0 : index
    %c0_4 = arith.constant 0 : index
    %3 = vector.load %arg2[%c0_3, %c0_4] : memref<21x1xf32, #tpu.memory_space<vmem>>, vector<21x1xf32>
    %4 = vector.broadcast %3 : vector<21x1xf32> to vector<21x128xf32>
    %5 = arith.addf %2, %4 : vector<21x128xf32>
    %c0_5 = arith.constant 0 : index
    %c0_6 = arith.constant 0 : index
    %6 = vector.load %arg3[%c0_5, %c0_6] : memref<21x128xf32, #tpu.memory_space<vmem>>, vector<21x128xf32>
    tpu.vector_store %arg3[%c0_5, %c0_6], %5 {strides = array<i32>} : memref<21x128xf32, #tpu.memory_space<vmem>>, vector<21x128xf32>,
    return
  }
}

module attributes {stable_mosaic.version = 11 : i64} {
  func.func @_yolo_kernel(%arg0: memref<2x7x192xf32, #tpu.memory_space<vmem>>, %arg1: memref<7x192xf32, #tpu.memory_space<vmem>>, %arg2: memref<7x192xf32, #tpu.memory_space<vmem>>, %arg3: memref<2x7x192xf32, #tpu.memory_space<vmem>>) attributes {dimension_semantics = [], scalar_prefetch = 0 : i64, scratch_operands = 0 : i64, tpu.core_type = #tpu.core_type<tc>} {
    %c0 = arith.constant 0 : index
    %c0_0 = arith.constant 0 : index
    %c0_1 = arith.constant 0 : index
    %0 = vector.load %arg0[%c0, %c0_0, %c0_1] : memref<2x7x192xf32, #tpu.memory_space<vmem>>, vector<2x7x192xf32>
    %1 = tpu.iota {dimensions = array<i32: 1>} : vector<2x7x192xi32>
    %cst = arith.constant 0.000000e+00 : f32
    %2 = vector.broadcast %cst : f32 to vector<2x7x192xf32>
    %3 = arith.subf %2, %0 : vector<2x7x192xf32>
    %4 = math.exp %3 : vector<2x7x192xf32>
    %cst_2 = arith.constant 1.000000e+00 : f32
    %5 = vector.broadcast %cst_2 : f32 to vector<2x7x192xf32>
    %6 = arith.addf %5, %4 : vector<2x7x192xf32>
    %cst_3 = arith.constant 1.000000e+00 : f32
    %7 = vector.broadcast %cst_3 : f32 to vector<2x7x192xf32>
    %8 = arith.divf %7, %6 : vector<2x7x192xf32>
    %c2_i32 = arith.constant 2 : i32
    %9 = vector.broadcast %c2_i32 : i32 to vector<2x7x192xi32>
    %10 = arith.cmpi sge, %1, %9 : vector<2x7x192xi32>
    %c4_i32 = arith.constant 4 : i32
    %11 = vector.broadcast %c4_i32 : i32 to vector<2x7x192xi32>
    %12 = arith.cmpi slt, %1, %11 : vector<2x7x192xi32>
    %13 = arith.andi %10, %12 : vector<2x7x192xi1>
    %c0_4 = arith.constant 0 : index
    %c0_5 = arith.constant 0 : index
    %14 = vector.load %arg1[%c0_4, %c0_5] : memref<7x192xf32, #tpu.memory_space<vmem>>, vector<7x192xf32>
    %15 = vector.shape_cast %14 : vector<7x192xf32> to vector<1x7x192xf32>
    %16 = vector.broadcast %15 : vector<1x7x192xf32> to vector<2x7x192xf32>
    %17 = arith.addf %8, %16 : vector<2x7x192xf32>
    %cst_6 = arith.constant 2.000000e+00 : f32
    %18 = vector.broadcast %cst_6 : f32 to vector<2x7x192xf32>
    %19 = arith.mulf %17, %18 : vector<2x7x192xf32>
    %cst_7 = arith.constant 0.000000e+00 : f32
    %20 = vector.broadcast %cst_7 : f32 to vector<2x7x192xf32>
    %21 = arith.select %13, %0, %20 : vector<2x7x192xi1>, vector<2x7x192xf32>
    %22 = math.exp %21 : vector<2x7x192xf32>
    %c0_8 = arith.constant 0 : index
    %c0_9 = arith.constant 0 : index
    %23 = vector.load %arg2[%c0_8, %c0_9] : memref<7x192xf32, #tpu.memory_space<vmem>>, vector<7x192xf32>
    %24 = vector.shape_cast %23 : vector<7x192xf32> to vector<1x7x192xf32>
    %25 = vector.broadcast %24 : vector<1x7x192xf32> to vector<2x7x192xf32>
    %26 = arith.mulf %22, %25 : vector<2x7x192xf32>
    %cst_10 = arith.constant 2.000000e+00 : f32
    %27 = vector.broadcast %cst_10 : f32 to vector<2x7x192xf32>
    %28 = arith.mulf %26, %27 : vector<2x7x192xf32>
    %c2_i32_11 = arith.constant 2 : i32
    %29 = vector.broadcast %c2_i32_11 : i32 to vector<2x7x192xi32>
    %30 = arith.cmpi slt, %1, %29 : vector<2x7x192xi32>
    %31 = arith.select %13, %28, %8 : vector<2x7x192xi1>, vector<2x7x192xf32>
    %32 = arith.select %30, %19, %31 : vector<2x7x192xi1>, vector<2x7x192xf32>
    %c0_12 = arith.constant 0 : index
    %c0_13 = arith.constant 0 : index
    %c0_14 = arith.constant 0 : index
    %33 = vector.load %arg3[%c0_12, %c0_13, %c0_14] : memref<2x7x192xf32, #tpu.memory_space<vmem>>, vector<2x7x192xf32>
    tpu.vector_store %arg3[%c0_12, %c0_13, %c0_14], %32 {strides = array<i32>} : memref<2x7x192xf32, #tpu.memory_space<vmem>>, vector<2x7x192xf32>,
    return
  }
}

</mosaic_0001>

<llo_original>
// kernel: _forward.9
$region0: #{_forward.9}
  #allocation0 [shape = 'u32[]', space=smem, size = 0x4, offset = 0x4, fixed_abs, tag = 'smem constant byte address 0x4 - core index']
  #allocation1 [shape = 'u32[144,128]{1,0:T(1,128)}', space=vmem, size = 0x12000, scoped, tag = 'internal scratch']
  %s0 = inlined_call_operand.vmem [shape: bf16[32,512], index: 0, kind: input, shape index: {}]
  %s1 = inlined_call_operand.vmem [shape: bf16[8,32], index: 1, kind: input, shape index: {}]
  %s2 = inlined_call_operand.vmem [shape: f32[8,1], index: 2, kind: input, shape index: {}]
  %s3 = inlined_call_operand.vmem [shape: f32[8,1], index: 3, kind: input, shape index: {}]
  %s4 = inlined_call_operand.vmem [shape: f32[8,512], index: 4, kind: output, shape index: {}]
  %s5 = sld [smem:[#allocation0]]
  $region26: #{_forward.9} parent=0
    _
  %s7 = ssub.s32 1, %s5
  %s8 = scalar_select 0, %s7, %s5
  // Predicated region
  $region2: #{_forward.9} parent=0 // pred_check
    _
  $region3: #{_forward.9} parent=0 // pred_check_branch
    %10 = sbr.rel (0) target = $region5
  $region4: #{_forward.9} parent=0 // pred_region
    _
  $region5: #{_forward.9} parent=0 // pred_fallthru
    _
  // Predicated region
  $region6: #{_forward.9} parent=0 // pred_check
    _
  $region7: #{_forward.9} parent=0 // pred_check_branch
    %12 = sbr.rel (0) target = $region9
  $region8: #{_forward.9} parent=0 // pred_region
    _
  $region9: #{_forward.9} parent=0 // pred_fallthru
    _
  // Predicated region
  $region10: #{_forward.9} parent=0 // pred_check
    _
  $region11: #{_forward.9} parent=0 // pred_check_branch
    %14 = sbr.rel (0) target = $region13
  $region12: #{_forward.9} parent=0 // pred_region
    _
  $region13: #{_forward.9} parent=0 // pred_fallthru
    _
  // Predicated region
  $region14: #{_forward.9} parent=0 // pred_check
    _
  $region15: #{_forward.9} parent=0 // pred_check_branch
    %16 = sbr.rel (0) target = $region17
  $region16: #{_forward.9} parent=0 // pred_region
    _
  $region17: #{_forward.9} parent=0 // pred_fallthru
    _
  %v18 = vld [vmem:[%s1] sm:$0xf]
  %v19 = vld [vmem:[%s0] sm:$0xff]
  %v20 = vld [vmem:[%s0 + $0x8] sm:$0xff]
  %v21 = vld [vmem:[%s0 + $0x10] sm:$0xff]
  %v22 = vld [vmem:[%s0 + $0x18] sm:$0xff]
  %v23 = vld [vmem:[%s0 + $0x20] sm:$0xff]
  %v24 = vld [vmem:[%s0 + $0x28] sm:$0xff]
  %v25 = vld [vmem:[%s0 + $0x30] sm:$0xff]
  %v26 = vld [vmem:[%s0 + $0x38] sm:$0xff]
  %v35 = vunpack.c.l.b16 %v19
  %v36 = vunpack.c.h.b16 %v19
  %v37 = vunpack.c.l.b16 %v20
  %v38 = vunpack.c.h.b16 %v20
  %v39 = vunpack.c.l.b16 %v21
  %v40 = vunpack.c.h.b16 %v21
  %v41 = vunpack.c.l.b16 %v22
  %v42 = vunpack.c.h.b16 %v22
  %v43 = vunpack.c.l.b16 %v23
  %v44 = vunpack.c.h.b16 %v23
  %v45 = vunpack.c.l.b16 %v24
  %v46 = vunpack.c.h.b16 %v24
  %v47 = vunpack.c.l.b16 %v25
  %v48 = vunpack.c.h.b16 %v25
  %v49 = vunpack.c.l.b16 %v26
  %v50 = vunpack.c.h.b16 %v26
  %v51 = vpack.c.b16 %v39, %v35
  %v52 = vpack.c.b16 %v40, %v36
  %v53 = vpack.c.b16 %v41, %v37
  %v54 = vpack.c.b16 %v42, %v38
  %v55 = vpack.c.b16 %v47, %v43
  %v56 = vpack.c.b16 %v48, %v44
  %v57 = vpack.c.b16 %v49, %v45
  %v58 = vpack.c.b16 %v50, %v46
  %vm67 = vcmask 261120
  %v69 = vsel %vm67, %v18, 0
  %71 = vmatprep.subr.bf16.mxu0 %v52
  %72 = vmatpush1.bf16.msra.mxu0 %v51
  %73 = vmatprep.subr.bf16.mxu0 %v56
  %74 = vmatpush1.bf16.msra.mxu0 %v55
  %75 = vmatprep.subr.bf16.mxu0 0
  %76 = vmatpush1.bf16.msra.mxu0 0
  %77 = vmatprep.subr.bf16.mxu0 0
  %78 = vmatpush1.bf16.msra.mxu0 0
  %79 = vmatprep.subr.bf16.mxu0 0
  %80 = vmatpush1.bf16.msra.mxu0 0
  %81 = vmatprep.subr.bf16.mxu0 0
  %82 = vmatpush1.bf16.msra.mxu0 0
  %83 = vmatprep.subr.bf16.mxu0 0
  %84 = vmatpush1.bf16.msra.mxu0 0
  %85 = vmatprep.subr.bf16.mxu0 0
  %86 = vmatpush1.bf16.msra.mxu0 0
  %87 = vmatprep.subr.bf16.mxu0 0
  %88 = vmatpush1.bf16.msra.mxu0 0
  %89 = vmatprep.subr.bf16.mxu0 0
  %90 = vmatpush1.bf16.msra.mxu0 0
  %91 = vmatprep.subr.bf16.mxu0 0
  %92 = vmatpush1.bf16.msra.mxu0 0
  %93 = vmatprep.subr.bf16.mxu0 0
  %94 = vmatpush1.bf16.msra.mxu0 0
  %95 = vmatprep.subr.bf16.mxu0 0
  %96 = vmatpush1.bf16.msra.mxu0 0
  %97 = vmatprep.subr.bf16.mxu0 0
  %98 = vmatpush1.bf16.msra.mxu0 0
  %99 = vmatprep.subr.bf16.mxu0 0
  %100 = vmatpush1.bf16.msra.mxu0 0
  %101 = vmatprep.subr.bf16.mxu0 0
  %102 = vmatpush1.bf16.msra.mxu0 0
  %103 = vmatprep.mubr.bf16.mxu0 0
  %104 = vmatmul.mubr.bf16.gmra.mrb[0].mxu0 %v69
  %v105 = vpop.f32.mrb[0].mxu0
  %v106 = vadd.f32 0.0, %v105
  %v107 = vpop.f32.mrb[0].mxu0
  %v108 = vadd.f32 0.0, %v107
  %v109 = vpop.f32.mrb[0].mxu0
  %v110 = vpop.f32.mrb[0].mxu0
  %111 = vdwg.mxu0
  %112 = vmatprep.subr.bf16.mxu0 %v54
  %113 = vmatpush1.bf16.msra.mxu0 %v53
  %114 = vmatprep.subr.bf16.mxu0 %v58
  %115 = vmatpush1.bf16.msra.mxu0 %v57
  %116 = vmatprep.subr.bf16.mxu0 0
  %117 = vmatpush1.bf16.msra.mxu0 0
  %118 = vmatprep.subr.bf16.mxu0 0
  %119 = vmatpush1.bf16.msra.mxu0 0
  %120 = vmatprep.subr.bf16.mxu0 0
  %121 = vmatpush1.bf16.msra.mxu0 0
  %122 = vmatprep.subr.bf16.mxu0 0
  %123 = vmatpush1.bf16.msra.mxu0 0
  %124 = vmatprep.subr.bf16.mxu0 0
  %125 = vmatpush1.bf16.msra.mxu0 0
  %126 = vmatprep.subr.bf16.mxu0 0
  %127 = vmatpush1.bf16.msra.mxu0 0
  %128 = vmatprep.subr.bf16.mxu0 0
  %129 = vmatpush1.bf16.msra.mxu0 0
  %130 = vmatprep.subr.bf16.mxu0 0
  %131 = vmatpush1.bf16.msra.mxu0 0
  %132 = vmatprep.subr.bf16.mxu0 0
  %133 = vmatpush1.bf16.msra.mxu0 0
  %134 = vmatprep.subr.bf16.mxu0 0
  %135 = vmatpush1.bf16.msra.mxu0 0
  %136 = vmatprep.subr.bf16.mxu0 0
  %137 = vmatpush1.bf16.msra.mxu0 0
  %138 = vmatprep.subr.bf16.mxu0 0
  %139 = vmatpush1.bf16.msra.mxu0 0
  %140 = vmatprep.subr.bf16.mxu0 0
  %141 = vmatpush1.bf16.msra.mxu0 0
  %142 = vmatprep.subr.bf16.mxu0 0
  %143 = vmatpush1.bf16.msra.mxu0 0
  %144 = vmatprep.mubr.bf16.mxu0 0
  %145 = vmatmul.mubr.bf16.gmra.mrb[0].mxu0 %v69
  %v146 = vpop.f32.mrb[0].mxu0
  %v147 = vadd.f32 0.0, %v146
  %v148 = vpop.f32.mrb[0].mxu0
  %v149 = vadd.f32 0.0, %v148
  %v150 = vpop.f32.mrb[0].mxu0
  %v151 = vpop.f32.mrb[0].mxu0
  %152 = vdwg.mxu0
  %v153 = vadd.f32 %v106, %v108
  %v154 = vadd.f32 %v153, %v147
  %v155 = vadd.f32 %v154, %v149
  %156 = vadd.xlane.f32.xlu0 %v155
  %v157 = vpop.xlane.xlu0 %156
  %v158 = vmul.f32 %v157, 0.001953125
  %v159 = vmul.f32 %v106, %v106
  %v160 = vmul.f32 %v108, %v108
  %v161 = vmul.f32 %v147, %v147
  %v162 = vmul.f32 %v149, %v149
  %v163 = vadd.f32 %v159, %v160
  %v164 = vadd.f32 %v163, %v161
  %v165 = vadd.f32 %v164, %v162
  %166 = vadd.xlane.f32.xlu0 %v165
  %v167 = vpop.xlane.xlu0 %166
  %v168 = vmul.f32 %v167, 0.001953125
  %v169 = vmul.f32 %v158, %v158
  %v170 = vsub.f32 %v168, %v169
  %v171 = vmax.f32 %v170, 0.0
  %v172 = vsub.f32 %v106, %v158
  %v173 = vsub.f32 %v108, %v158
  %v174 = vsub.f32 %v147, %v158
  %v175 = vsub.f32 %v149, %v158
  %v176 = vadd.f32 %v171, 1e-05
  %v177 = vrsqrt.pop %v176
  %v178 = vmul.f32 %v172, %v177
  %v179 = vmul.f32 %v173, %v177
  %v180 = vmul.f32 %v174, %v177
  %v181 = vmul.f32 %v175, %v177
  %v182 = vld [vmem:[%s2] sm:$0xff]
  %184 = vset.pattern.permute.xlu0 0
  %185 = vperm.xlu0 %184, %v182
  %v186 = vpop.permute.xlu0 %185
  %v188 = vmul.f32 %v178, %v186
  %v189 = vmul.f32 %v179, %v186
  %v190 = vmul.f32 %v180, %v186
  %v191 = vmul.f32 %v181, %v186
  %v192 = vld [vmem:[%s3] sm:$0xff]
  %194 = vset.pattern.permute.xlu0 0
  %195 = vperm.xlu0 %194, %v192
  %v196 = vpop.permute.xlu0 %195
  %v198 = vadd.f32 %v188, %v196
  %v199 = vadd.f32 %v189, %v196
  %v200 = vadd.f32 %v190, %v196
  %v201 = vadd.f32 %v191, %v196
  %v202 = vmul.f32 %v198, 0.1
  %v203 = vmul.f32 %v199, 0.1
  %v204 = vmul.f32 %v200, 0.1
  %v205 = vmul.f32 %v201, 0.1
  %v206 = vmax.f32 %v198, %v202
  %v207 = vmax.f32 %v199, %v203
  %v208 = vmax.f32 %v200, %v204
  %v209 = vmax.f32 %v201, %v205
  %210 = vst [vmem:[%s4] sm:$0xff] %v206
  %211 = vst [vmem:[%s4 + $0x8] sm:$0xff] %v207
  %212 = vst [vmem:[%s4 + $0x10] sm:$0xff] %v208
  %213 = vst [vmem:[%s4 + $0x18] sm:$0xff] %v209
  // Predicated region
  $region18: #{_forward.9} parent=0 // pred_check
    _
  $region19: #{_forward.9} parent=0 // pred_check_branch
    %215 = sbr.rel (0) target = $region21
  $region20: #{_forward.9} parent=0 // pred_region
    _
  $region21: #{_forward.9} parent=0 // pred_fallthru
    _
  // Predicated region
  $region22: #{_forward.9} parent=0 // pred_check
    _
  $region23: #{_forward.9} parent=0 // pred_check_branch
    %217 = sbr.rel (0) target = $region25
  $region24: #{_forward.9} parent=0 // pred_region
    _
  $region25: #{_forward.9} parent=0 // pred_fallthru
    _

// kernel: _forward.11
$region0: #{_forward.11}
  #allocation0 [shape = 'u32[]', space=smem, size = 0x4, offset = 0x4, fixed_abs, tag = 'smem constant byte address 0x4 - core index']
  #allocation1 [shape = 'u32[144,128]{1,0:T(1,128)}', space=vmem, size = 0x12000, scoped, tag = 'internal scratch']
  %s0 = inlined_call_operand.vmem [shape: bf16[16,128], index: 0, kind: input, shape index: {}]
  %s1 = inlined_call_operand.vmem [shape: bf16[16,16], index: 1, kind: input, shape index: {}]
  %s2 = inlined_call_operand.vmem [shape: f32[16,1], index: 2, kind: input, shape index: {}]
  %s3 = inlined_call_operand.vmem [shape: f32[16,1], index: 3, kind: input, shape index: {}]
  %s4 = inlined_call_operand.vmem [shape: f32[16,128], index: 4, kind: output, shape index: {}]
  %s5 = sld [smem:[#allocation0]]
  $region26: #{_forward.11} parent=0
    _
  %s7 = ssub.s32 1, %s5
  %s8 = scalar_select 0, %s7, %s5
  // Predicated region
  $region2: #{_forward.11} parent=0 // pred_check
    _
  $region3: #{_forward.11} parent=0 // pred_check_branch
    %10 = sbr.rel (0) target = $region5
  $region4: #{_forward.11} parent=0 // pred_region
    _
  $region5: #{_forward.11} parent=0 // pred_fallthru
    _
  // Predicated region
  $region6: #{_forward.11} parent=0 // pred_check
    _
  $region7: #{_forward.11} parent=0 // pred_check_branch
    %12 = sbr.rel (0) target = $region9
  $region8: #{_forward.11} parent=0 // pred_region
    _
  $region9: #{_forward.11} parent=0 // pred_fallthru
    _
  // Predicated region
  $region10: #{_forward.11} parent=0 // pred_check
    _
  $region11: #{_forward.11} parent=0 // pred_check_branch
    %14 = sbr.rel (0) target = $region13
  $region12: #{_forward.11} parent=0 // pred_region
    _
  $region13: #{_forward.11} parent=0 // pred_fallthru
    _
  // Predicated region
  $region14: #{_forward.11} parent=0 // pred_check
    _
  $region15: #{_forward.11} parent=0 // pred_check_branch
    %16 = sbr.rel (0) target = $region17
  $region16: #{_forward.11} parent=0 // pred_region
    _
  $region17: #{_forward.11} parent=0 // pred_fallthru
    _
  %v18 = vld [vmem:[%s1] sm:$0xf]
  %v19 = vld [vmem:[%s1 + $0x4] sm:$0xf]
  %v20 = vld [vmem:[%s0] sm:$0xf]
  %v21 = vld [vmem:[%s0 + $0x4] sm:$0xf]
  %v24 = vunpack.c.l.b16 %v18
  %v25 = vunpack.c.l.b16 %v19
  %v26 = vpack.c.b16 %v25, %v24
  %v29 = vunpack.c.l.b16 %v20
  %v30 = vunpack.c.l.b16 %v21
  %v31 = vpack.c.b16 %v30, %v29
  %vm33 = vcmask 130048
  %v35 = vsel %vm33, %v26, 0
  %37 = vmatprep.subr.bf16.mxu0 0
  %38 = vmatpush1.bf16.msra.mxu0 %v31
  %39 = vmatprep.subr.bf16.mxu0 0
  %40 = vmatpush1.bf16.msra.mxu0 0
  %41 = vmatprep.subr.bf16.mxu0 0
  %42 = vmatpush1.bf16.msra.mxu0 0
  %43 = vmatprep.subr.bf16.mxu0 0
  %44 = vmatpush1.bf16.msra.mxu0 0
  %45 = vmatprep.subr.bf16.mxu0 0
  %46 = vmatpush1.bf16.msra.mxu0 0
  %47 = vmatprep.subr.bf16.mxu0 0
  %48 = vmatpush1.bf16.msra.mxu0 0
  %49 = vmatprep.subr.bf16.mxu0 0
  %50 = vmatpush1.bf16.msra.mxu0 0
  %51 = vmatprep.subr.bf16.mxu0 0
  %52 = vmatpush1.bf16.msra.mxu0 0
  %53 = vmatprep.subr.bf16.mxu0 0
  %54 = vmatpush1.bf16.msra.mxu0 0
  %55 = vmatprep.subr.bf16.mxu0 0
  %56 = vmatpush1.bf16.msra.mxu0 0
  %57 = vmatprep.subr.bf16.mxu0 0
  %58 = vmatpush1.bf16.msra.mxu0 0
  %59 = vmatprep.subr.bf16.mxu0 0
  %60 = vmatpush1.bf16.msra.mxu0 0
  %61 = vmatprep.subr.bf16.mxu0 0
  %62 = vmatpush1.bf16.msra.mxu0 0
  %63 = vmatprep.subr.bf16.mxu0 0
  %64 = vmatpush1.bf16.msra.mxu0 0
  %65 = vmatprep.subr.bf16.mxu0 0
  %66 = vmatpush1.bf16.msra.mxu0 0
  %67 = vmatprep.subr.bf16.mxu0 0
  %68 = vmatpush1.bf16.msra.mxu0 0
  %69 = vmatprep.mubr.bf16.mxu0 0
  %70 = vmatmul.mubr.bf16.gmra.mrb[0].mxu0 %v35
  %v71 = vpop.f32.mrb[0].mxu0
  %v72 = vadd.f32 0.0, %v71
  %v73 = vpop.f32.mrb[0].mxu0
  %v74 = vpop.f32.mrb[0].mxu0
  %v75 = vadd.f32 0.0, %v74
  %v76 = vpop.f32.mrb[0].mxu0
  %77 = vdwg.mxu0
  %78 = vadd.xlane.f32.xlu0 %v72
  %v79 = vpop.xlane.xlu0 %78
  %80 = vadd.xlane.f32.xlu0 %v75
  %v81 = vpop.xlane.xlu0 %80
  %v82 = vmul.f32 %v79, 0.0078125
  %v83 = vmul.f32 %v81, 0.0078125
  %v84 = vmul.f32 %v72, %v72
  %v85 = vmul.f32 %v75, %v75
  %86 = vadd.xlane.f32.xlu0 %v84
  %v87 = vpop.xlane.xlu0 %86
  %88 = vadd.xlane.f32.xlu0 %v85
  %v89 = vpop.xlane.xlu0 %88
  %v90 = vmul.f32 %v87, 0.0078125
  %v91 = vmul.f32 %v89, 0.0078125
  %v92 = vmul.f32 %v82, %v82
  %v93 = vmul.f32 %v83, %v83
  %v94 = vsub.f32 %v90, %v92
  %v95 = vsub.f32 %v91, %v93
  %v96 = vmax.f32 %v94, 0.0
  %v97 = vmax.f32 %v95, 0.0
  %v98 = vsub.f32 %v72, %v82
  %v99 = vsub.f32 %v75, %v83
  %v100 = vadd.f32 %v96, 1e-05
  %v101 = vadd.f32 %v97, 1e-05
  %v102 = vrsqrt.pop %v100
  %v103 = vrsqrt.pop %v101
  %v104 = vmul.f32 %v98, %v102
  %v105 = vmul.f32 %v99, %v103
  %v106 = vld [vmem:[%s2] sm:$0xff]
  %v107 = vld [vmem:[%s2 + $0x8] sm:$0xff]
  %109 = vset.pattern.permute.xlu0 0
  %110 = vperm.xlu0 %109, %v106
  %v111 = vpop.permute.xlu0 %110
  %114 = vset.pattern.permute.xlu0 0
  %115 = vperm.xlu0 %114, %v107
  %v116 = vpop.permute.xlu0 %115
  %v118 = vmul.f32 %v104, %v111
  %v119 = vmul.f32 %v105, %v116
  %v120 = vld [vmem:[%s3] sm:$0xff]
  %v121 = vld [vmem:[%s3 + $0x8] sm:$0xff]
  %123 = vset.pattern.permute.xlu0 0
  %124 = vperm.xlu0 %123, %v120
  %v125 = vpop.permute.xlu0 %124
  %128 = vset.pattern.permute.xlu0 0
  %129 = vperm.xlu0 %128, %v121
  %v130 = vpop.permute.xlu0 %129
  %v132 = vadd.f32 %v118, %v125
  %v133 = vadd.f32 %v119, %v130
  %v134 = vmul.f32 %v132, 0.1
  %v135 = vmul.f32 %v133, 0.1
  %v136 = vmax.f32 %v132, %v134
  %v137 = vmax.f32 %v133, %v135
  %138 = vst [vmem:[%s4] sm:$0xff] %v136
  %139 = vst [vmem:[%s4 + $0x8] sm:$0xff] %v137
  // Predicated region
  $region18: #{_forward.11} parent=0 // pred_check
    _
  $region19: #{_forward.11} parent=0 // pred_check_branch
    %141 = sbr.rel (0) target = $region21
  $region20: #{_forward.11} parent=0 // pred_region
    _
  $region21: #{_forward.11} parent=0 // pred_fallthru
    _
  // Predicated region
  $region22: #{_forward.11} parent=0 // pred_check
    _
  $region23: #{_forward.11} parent=0 // pred_check_branch
    %143 = sbr.rel (0) target = $region25
  $region24: #{_forward.11} parent=0 // pred_region
    _
  $region25: #{_forward.11} parent=0 // pred_fallthru
    _

// kernel: _forward.10
$region0: #{_forward.10}
  #allocation0 [shape = 'u32[]', space=smem, size = 0x4, offset = 0x4, fixed_abs, tag = 'smem constant byte address 0x4 - core index']
  #allocation1 [shape = 'u32[144,128]{1,0:T(1,128)}', space=vmem, size = 0x12000, scoped, tag = 'internal scratch']
  %s0 = inlined_call_operand.vmem [shape: bf16[80,128], index: 0, kind: input, shape index: {}]
  %s1 = inlined_call_operand.vmem [shape: bf16[16,80], index: 1, kind: input, shape index: {}]
  %s2 = inlined_call_operand.vmem [shape: f32[16,1], index: 2, kind: input, shape index: {}]
  %s3 = inlined_call_operand.vmem [shape: f32[16,1], index: 3, kind: input, shape index: {}]
  %s4 = inlined_call_operand.vmem [shape: f32[16,128], index: 4, kind: output, shape index: {}]
  %s5 = sld [smem:[#allocation0]]
  $region26: #{_forward.10} parent=0
    _
  %s7 = ssub.s32 1, %s5
  %s8 = scalar_select 0, %s7, %s5
  // Predicated region
  $region2: #{_forward.10} parent=0 // pred_check
    _
  $region3: #{_forward.10} parent=0 // pred_check_branch
    %10 = sbr.rel (0) target = $region5
  $region4: #{_forward.10} parent=0 // pred_region
    _
  $region5: #{_forward.10} parent=0 // pred_fallthru
    _
  // Predicated region
  $region6: #{_forward.10} parent=0 // pred_check
    _
  $region7: #{_forward.10} parent=0 // pred_check_branch
    %12 = sbr.rel (0) target = $region9
  $region8: #{_forward.10} parent=0 // pred_region
    _
  $region9: #{_forward.10} parent=0 // pred_fallthru
    _
  // Predicated region
  $region10: #{_forward.10} parent=0 // pred_check
    _
  $region11: #{_forward.10} parent=0 // pred_check_branch
    %14 = sbr.rel (0) target = $region13
  $region12: #{_forward.10} parent=0 // pred_region
    _
  $region13: #{_forward.10} parent=0 // pred_fallthru
    _
  // Predicated region
  $region14: #{_forward.10} parent=0 // pred_check
    _
  $region15: #{_forward.10} parent=0 // pred_check_branch
    %16 = sbr.rel (0) target = $region17
  $region16: #{_forward.10} parent=0 // pred_region
    _
  $region17: #{_forward.10} parent=0 // pred_fallthru
    _
  %v18 = vld [vmem:[%s1] sm:$0xf]
  %v19 = vld [vmem:[%s1 + $0x4] sm:$0xf]
  %v20 = vld [vmem:[%s0] sm:$0xf]
  %v21 = vld [vmem:[%s0 + $0x4] sm:$0xf]
  %v22 = vld [vmem:[%s0 + $0x8] sm:$0xf]
  %v23 = vld [vmem:[%s0 + $0xc] sm:$0xf]
  %v24 = vld [vmem:[%s0 + $0x10] sm:$0xf]
  %v25 = vld [vmem:[%s0 + $0x14] sm:$0xf]
  %v26 = vld [vmem:[%s0 + $0x18] sm:$0xf]
  %v27 = vld [vmem:[%s0 + $0x1c] sm:$0xf]
  %v28 = vld [vmem:[%s0 + $0x20] sm:$0xf]
  %v29 = vld [vmem:[%s0 + $0x24] sm:$0xf]
  %v32 = vunpack.c.l.b16 %v18
  %v33 = vunpack.c.l.b16 %v19
  %v34 = vpack.c.b16 %v33, %v32
  %v45 = vunpack.c.l.b16 %v20
  %v46 = vunpack.c.l.b16 %v21
  %v47 = vunpack.c.l.b16 %v22
  %v48 = vunpack.c.l.b16 %v23
  %v49 = vunpack.c.l.b16 %v24
  %v50 = vunpack.c.l.b16 %v25
  %v51 = vunpack.c.l.b16 %v26
  %v52 = vunpack.c.l.b16 %v27
  %v53 = vunpack.c.l.b16 %v28
  %v54 = vunpack.c.l.b16 %v29
  %v55 = vpack.c.b16 %v46, %v45
  %v56 = vpack.c.b16 %v48, %v47
  %v57 = vpack.c.b16 %v50, %v49
  %v58 = vpack.c.b16 %v52, %v51
  %v59 = vpack.c.b16 %v54, %v53
  %vm65 = vcmask 654336
  %v67 = vsel %vm65, %v34, 0
  %69 = vmatprep.subr.bf16.mxu0 0
  %70 = vmatpush1.bf16.msra.mxu0 %v55
  %71 = vmatprep.subr.bf16.mxu0 0
  %72 = vmatpush1.bf16.msra.mxu0 %v56
  %73 = vmatprep.subr.bf16.mxu0 0
  %74 = vmatpush1.bf16.msra.mxu0 %v57
  %75 = vmatprep.subr.bf16.mxu0 0
  %76 = vmatpush1.bf16.msra.mxu0 %v58
  %77 = vmatprep.subr.bf16.mxu0 0
  %78 = vmatpush1.bf16.msra.mxu0 %v59
  %79 = vmatprep.subr.bf16.mxu0 0
  %80 = vmatpush1.bf16.msra.mxu0 0
  %81 = vmatprep.subr.bf16.mxu0 0
  %82 = vmatpush1.bf16.msra.mxu0 0
  %83 = vmatprep.subr.bf16.mxu0 0
  %84 = vmatpush1.bf16.msra.mxu0 0
  %85 = vmatprep.subr.bf16.mxu0 0
  %86 = vmatpush1.bf16.msra.mxu0 0
  %87 = vmatprep.subr.bf16.mxu0 0
  %88 = vmatpush1.bf16.msra.mxu0 0
  %89 = vmatprep.subr.bf16.mxu0 0
  %90 = vmatpush1.bf16.msra.mxu0 0
  %91 = vmatprep.subr.bf16.mxu0 0
  %92 = vmatpush1.bf16.msra.mxu0 0
  %93 = vmatprep.subr.bf16.mxu0 0
  %94 = vmatpush1.bf16.msra.mxu0 0
  %95 = vmatprep.subr.bf16.mxu0 0
  %96 = vmatpush1.bf16.msra.mxu0 0
  %97 = vmatprep.subr.bf16.mxu0 0
  %98 = vmatpush1.bf16.msra.mxu0 0
  %99 = vmatprep.subr.bf16.mxu0 0
  %100 = vmatpush1.bf16.msra.mxu0 0
  %101 = vmatprep.mubr.bf16.mxu0 0
  %102 = vmatmul.mubr.bf16.gmra.mrb[0].mxu0 %v67
  %v103 = vpop.f32.mrb[0].mxu0
  %v104 = vadd.f32 0.0, %v103
  %v105 = vpop.f32.mrb[0].mxu0
  %v106 = vpop.f32.mrb[0].mxu0
  %v107 = vadd.f32 0.0, %v106
  %v108 = vpop.f32.mrb[0].mxu0
  %109 = vdwg.mxu0
  %110 = vadd.xlane.f32.xlu0 %v104
  %v111 = vpop.xlane.xlu0 %110
  %112 = vadd.xlane.f32.xlu0 %v107
  %v113 = vpop.xlane.xlu0 %112
  %v114 = vmul.f32 %v111, 0.0078125
  %v115 = vmul.f32 %v113, 0.0078125
  %v116 = vmul.f32 %v104, %v104
  %v117 = vmul.f32 %v107, %v107
  %118 = vadd.xlane.f32.xlu0 %v116
  %v119 = vpop.xlane.xlu0 %118
  %120 = vadd.xlane.f32.xlu0 %v117
  %v121 = vpop.xlane.xlu0 %120
  %v122 = vmul.f32 %v119, 0.0078125
  %v123 = vmul.f32 %v121, 0.0078125
  %v124 = vmul.f32 %v114, %v114
  %v125 = vmul.f32 %v115, %v115
  %v126 = vsub.f32 %v122, %v124
  %v127 = vsub.f32 %v123, %v125
  %v128 = vmax.f32 %v126, 0.0
  %v129 = vmax.f32 %v127, 0.0
  %v130 = vsub.f32 %v104, %v114
  %v131 = vsub.f32 %v107, %v115
  %v132 = vadd.f32 %v128, 1e-05
  %v133 = vadd.f32 %v129, 1e-05
  %v134 = vrsqrt.pop %v132
  %v135 = vrsqrt.pop %v133
  %v136 = vmul.f32 %v130, %v134
  %v137 = vmul.f32 %v131, %v135
  %v138 = vld [vmem:[%s2] sm:$0xff]
  %v139 = vld [vmem:[%s2 + $0x8] sm:$0xff]
  %141 = vset.pattern.permute.xlu0 0
  %142 = vperm.xlu0 %141, %v138
  %v143 = vpop.permute.xlu0 %142
  %146 = vset.pattern.permute.xlu0 0
  %147 = vperm.xlu0 %146, %v139
  %v148 = vpop.permute.xlu0 %147
  %v150 = vmul.f32 %v136, %v143
  %v151 = vmul.f32 %v137, %v148
  %v152 = vld [vmem:[%s3] sm:$0xff]
  %v153 = vld [vmem:[%s3 + $0x8] sm:$0xff]
  %155 = vset.pattern.permute.xlu0 0
  %156 = vperm.xlu0 %155, %v152
  %v157 = vpop.permute.xlu0 %156
  %160 = vset.pattern.permute.xlu0 0
  %161 = vperm.xlu0 %160, %v153
  %v162 = vpop.permute.xlu0 %161
  %v164 = vadd.f32 %v150, %v157
  %v165 = vadd.f32 %v151, %v162
  %v166 = vmul.f32 %v164, 0.1
  %v167 = vmul.f32 %v165, 0.1
  %v168 = vmax.f32 %v164, %v166
  %v169 = vmax.f32 %v165, %v167
  %170 = vst [vmem:[%s4] sm:$0xff] %v168
  %171 = vst [vmem:[%s4 + $0x8] sm:$0xff] %v169
  // Predicated region
  $region18: #{_forward.10} parent=0 // pred_check
    _
  $region19: #{_forward.10} parent=0 // pred_check_branch
    %173 = sbr.rel (0) target = $region21
  $region20: #{_forward.10} parent=0 // pred_region
    _
  $region21: #{_forward.10} parent=0 // pred_fallthru
    _
  // Predicated region
  $region22: #{_forward.10} parent=0 // pred_check
    _
  $region23: #{_forward.10} parent=0 // pred_check_branch
    %175 = sbr.rel (0) target = $region25
  $region24: #{_forward.10} parent=0 // pred_region
    _
  $region25: #{_forward.10} parent=0 // pred_fallthru
    _

// kernel: _forward.12
$region0: #{_forward.12}
  #allocation0 [shape = 'u32[]', space=smem, size = 0x4, offset = 0x4, fixed_abs, tag = 'smem constant byte address 0x4 - core index']
  #allocation1 [shape = 'u32[144,128]{1,0:T(1,128)}', space=vmem, size = 0x12000, scoped, tag = 'internal scratch']
  %s0 = inlined_call_operand.vmem [shape: f32[16,128], index: 0, kind: input, shape index: {}]
  %s1 = inlined_call_operand.vmem [shape: f32[16,128], index: 1, kind: input, shape index: {}]
  %s2 = inlined_call_operand.vmem [shape: f32[16,128], index: 2, kind: output, shape index: {}]
  %s3 = sld [smem:[#allocation0]]
  $region18: #{_forward.12} parent=0
    _
  %s5 = ssub.s32 1, %s3
  %s6 = scalar_select 0, %s5, %s3
  // Predicated region
  $region2: #{_forward.12} parent=0 // pred_check
    _
  $region3: #{_forward.12} parent=0 // pred_check_branch
    %8 = sbr.rel (0) target = $region5
  $region4: #{_forward.12} parent=0 // pred_region
    _
  $region5: #{_forward.12} parent=0 // pred_fallthru
    _
  // Predicated region
  $region6: #{_forward.12} parent=0 // pred_check
    _
  $region7: #{_forward.12} parent=0 // pred_check_branch
    %10 = sbr.rel (0) target = $region9
  $region8: #{_forward.12} parent=0 // pred_region
    _
  $region9: #{_forward.12} parent=0 // pred_fallthru
    _
  %v11 = vld [vmem:[%s0] sm:$0xff]
  %v12 = vld [vmem:[%s0 + $0x8] sm:$0xff]
  %v13 = vld [vmem:[%s1] sm:$0xff]
  %v14 = vld [vmem:[%s1 + $0x8] sm:$0xff]
  %v15 = vadd.f32 %v11, %v13
  %v16 = vadd.f32 %v12, %v14
  %17 = vst [vmem:[%s2] sm:$0xff] %v15
  %18 = vst [vmem:[%s2 + $0x8] sm:$0xff] %v16
  // Predicated region
  $region10: #{_forward.12} parent=0 // pred_check
    _
  $region11: #{_forward.12} parent=0 // pred_check_branch
    %20 = sbr.rel (0) target = $region13
  $region12: #{_forward.12} parent=0 // pred_region
    _
  $region13: #{_forward.12} parent=0 // pred_fallthru
    _
  // Predicated region
  $region14: #{_forward.12} parent=0 // pred_check
    _
  $region15: #{_forward.12} parent=0 // pred_check_branch
    %22 = sbr.rel (0) target = $region17
  $region16: #{_forward.12} parent=0 // pred_region
    _
  $region17: #{_forward.12} parent=0 // pred_fallthru
    _

// kernel: _forward.15
$region0: #{_forward.15}
  #allocation0 [shape = 'u32[]', space=smem, size = 0x4, offset = 0x4, fixed_abs, tag = 'smem constant byte address 0x4 - core index']
  #allocation1 [shape = 'u32[144,128]{1,0:T(1,128)}', space=vmem, size = 0x12000, scoped, tag = 'internal scratch']
  %s0 = inlined_call_operand.vmem [shape: bf16[16,128], index: 0, kind: input, shape index: {}]
  %s1 = inlined_call_operand.vmem [shape: bf16[8,16], index: 1, kind: input, shape index: {}]
  %s2 = inlined_call_operand.vmem [shape: f32[8,1], index: 2, kind: input, shape index: {}]
  %s3 = inlined_call_operand.vmem [shape: f32[8,1], index: 3, kind: input, shape index: {}]
  %s4 = inlined_call_operand.vmem [shape: f32[8,128], index: 4, kind: output, shape index: {}]
  %s5 = sld [smem:[#allocation0]]
  $region26: #{_forward.15} parent=0
    _
  %s7 = ssub.s32 1, %s5
  %s8 = scalar_select 0, %s7, %s5
  // Predicated region
  $region2: #{_forward.15} parent=0 // pred_check
    _
  $region3: #{_forward.15} parent=0 // pred_check_branch
    %10 = sbr.rel (0) target = $region5
  $region4: #{_forward.15} parent=0 // pred_region
    _
  $region5: #{_forward.15} parent=0 // pred_fallthru
    _
  // Predicated region
  $region6: #{_forward.15} parent=0 // pred_check
    _
  $region7: #{_forward.15} parent=0 // pred_check_branch
    %12 = sbr.rel (0) target = $region9
  $region8: #{_forward.15} parent=0 // pred_region
    _
  $region9: #{_forward.15} parent=0 // pred_fallthru
    _
  // Predicated region
  $region10: #{_forward.15} parent=0 // pred_check
    _
  $region11: #{_forward.15} parent=0 // pred_check_branch
    %14 = sbr.rel (0) target = $region13
  $region12: #{_forward.15} parent=0 // pred_region
    _
  $region13: #{_forward.15} parent=0 // pred_fallthru
    _
  // Predicated region
  $region14: #{_forward.15} parent=0 // pred_check
    _
  $region15: #{_forward.15} parent=0 // pred_check_branch
    %16 = sbr.rel (0) target = $region17
  $region16: #{_forward.15} parent=0 // pred_region
    _
  $region17: #{_forward.15} parent=0 // pred_fallthru
    _
  %v18 = vld [vmem:[%s1] sm:$0xf]
  %v19 = vld [vmem:[%s0] sm:$0xf]
  %v20 = vld [vmem:[%s0 + $0x4] sm:$0xf]
  %v23 = vunpack.c.l.b16 %v19
  %v24 = vunpack.c.l.b16 %v20
  %v25 = vpack.c.b16 %v24, %v23
  %vm27 = vcmask 130048
  %v29 = vsel %vm27, %v18, 0
  %31 = vmatprep.subr.bf16.mxu0 0
  %32 = vmatpush1.bf16.msra.mxu0 %v25
  %33 = vmatprep.subr.bf16.mxu0 0
  %34 = vmatpush1.bf16.msra.mxu0 0
  %35 = vmatprep.subr.bf16.mxu0 0
  %36 = vmatpush1.bf16.msra.mxu0 0
  %37 = vmatprep.subr.bf16.mxu0 0
  %38 = vmatpush1.bf16.msra.mxu0 0
  %39 = vmatprep.subr.bf16.mxu0 0
  %40 = vmatpush1.bf16.msra.mxu0 0
  %41 = vmatprep.subr.bf16.mxu0 0
  %42 = vmatpush1.bf16.msra.mxu0 0
  %43 = vmatprep.subr.bf16.mxu0 0
  %44 = vmatpush1.bf16.msra.mxu0 0
  %45 = vmatprep.subr.bf16.mxu0 0
  %46 = vmatpush1.bf16.msra.mxu0 0
  %47 = vmatprep.subr.bf16.mxu0 0
  %48 = vmatpush1.bf16.msra.mxu0 0
  %49 = vmatprep.subr.bf16.mxu0 0
  %50 = vmatpush1.bf16.msra.mxu0 0
  %51 = vmatprep.subr.bf16.mxu0 0
  %52 = vmatpush1.bf16.msra.mxu0 0
  %53 = vmatprep.subr.bf16.mxu0 0
  %54 = vmatpush1.bf16.msra.mxu0 0
  %55 = vmatprep.subr.bf16.mxu0 0
  %56 = vmatpush1.bf16.msra.mxu0 0
  %57 = vmatprep.subr.bf16.mxu0 0
  %58 = vmatpush1.bf16.msra.mxu0 0
  %59 = vmatprep.subr.bf16.mxu0 0
  %60 = vmatpush1.bf16.msra.mxu0 0
  %61 = vmatprep.subr.bf16.mxu0 0
  %62 = vmatpush1.bf16.msra.mxu0 0
  %63 = vmatprep.mubr.bf16.mxu0 0
  %64 = vmatmul.mubr.bf16.gmra.mrb[0].mxu0 %v29
  %v65 = vpop.f32.mrb[0].mxu0
  %v66 = vadd.f32 0.0, %v65
  %v67 = vpop.f32.mrb[0].mxu0
  %v68 = vpop.f32.mrb[0].mxu0
  %v69 = vpop.f32.mrb[0].mxu0
  %70 = vdwg.mxu0
  %71 = vadd.xlane.f32.xlu0 %v66
  %v72 = vpop.xlane.xlu0 %71
  %v73 = vmul.f32 %v72, 0.0078125
  %v74 = vmul.f32 %v66, %v66
  %75 = vadd.xlane.f32.xlu0 %v74
  %v76 = vpop.xlane.xlu0 %75
  %v77 = vmul.f32 %v76, 0.0078125
  %v78 = vmul.f32 %v73, %v73
  %v79 = vsub.f32 %v77, %v78
  %v80 = vmax.f32 %v79, 0.0
  %v81 = vsub.f32 %v66, %v73
  %v82 = vadd.f32 %v80, 1e-05
  %v83 = vrsqrt.pop %v82
  %v84 = vmul.f32 %v81, %v83
  %v85 = vld [vmem:[%s2] sm:$0xff]
  %87 = vset.pattern.permute.xlu0 0
  %88 = vperm.xlu0 %87, %v85
  %v89 = vpop.permute.xlu0 %88
  %v91 = vmul.f32 %v84, %v89
  %v92 = vld [vmem:[%s3] sm:$0xff]
  %94 = vset.pattern.permute.xlu0 0
  %95 = vperm.xlu0 %94, %v92
  %v96 = vpop.permute.xlu0 %95
  %v98 = vadd.f32 %v91, %v96
  %v99 = vmul.f32 %v98, 0.1
  %v100 = vmax.f32 %v98, %v99
  %101 = vst [vmem:[%s4] sm:$0xff] %v100
  // Predicated region
  $region18: #{_forward.15} parent=0 // pred_check
    _
  $region19: #{_forward.15} parent=0 // pred_check_branch
    %103 = sbr.rel (0) target = $region21
  $region20: #{_forward.15} parent=0 // pred_region
    _
  $region21: #{_forward.15} parent=0 // pred_fallthru
    _
  // Predicated region
  $region22: #{_forward.15} parent=0 // pred_check
    _
  $region23: #{_forward.15} parent=0 // pred_check_branch
    %105 = sbr.rel (0) target = $region25
  $region24: #{_forward.15} parent=0 // pred_region
    _
  $region25: #{_forward.15} parent=0 // pred_fallthru
    _

// kernel: _forward.16
$region0: #{_forward.16}
  #allocation0 [shape = 'u32[]', space=smem, size = 0x4, offset = 0x4, fixed_abs, tag = 'smem constant byte address 0x4 - core index']
  #allocation1 [shape = 'u32[144,128]{1,0:T(1,128)}', space=vmem, size = 0x12000, scoped, tag = 'internal scratch']
  %s0 = inlined_call_operand.vmem [shape: bf16[16,512], index: 0, kind: input, shape index: {}]
  %s1 = inlined_call_operand.vmem [shape: bf16[21,16], index: 1, kind: input, shape index: {}]
  %s2 = inlined_call_operand.vmem [shape: f32[21,1], index: 2, kind: input, shape index: {}]
  %s3 = inlined_call_operand.vmem [shape: f32[21,512], index: 3, kind: output, shape index: {}]
  %s4 = sld [smem:[#allocation0]]
  $region22: #{_forward.16} parent=0
    _
  %s6 = ssub.s32 1, %s4
  %s7 = scalar_select 0, %s6, %s4
  // Predicated region
  $region2: #{_forward.16} parent=0 // pred_check
    _
  $region3: #{_forward.16} parent=0 // pred_check_branch
    %9 = sbr.rel (0) target = $region5
  $region4: #{_forward.16} parent=0 // pred_region
    _
  $region5: #{_forward.16} parent=0 // pred_fallthru
    _
  // Predicated region
  $region6: #{_forward.16} parent=0 // pred_check
    _
  $region7: #{_forward.16} parent=0 // pred_check_branch
    %11 = sbr.rel (0) target = $region9
  $region8: #{_forward.16} parent=0 // pred_region
    _
  $region9: #{_forward.16} parent=0 // pred_fallthru
    _
  // Predicated region
  $region10: #{_forward.16} parent=0 // pred_check
    _
  $region11: #{_forward.16} parent=0 // pred_check_branch
    %13 = sbr.rel (0) target = $region13
  $region12: #{_forward.16} parent=0 // pred_region
    _
  $region13: #{_forward.16} parent=0 // pred_fallthru
    _
  %v15 = vld [vmem:[%s1] sm:$0xf]
  %v16 = vld [vmem:[%s1 + $0x4] sm:$0xf]
  %v17 = vld [vmem:[%s1 + $0x8] sm:$0x7]
  %v18 = vld [vmem:[%s0] sm:$0xff]
  %v19 = vld [vmem:[%s0 + $0x8] sm:$0xff]
  %v20 = vld [vmem:[%s0 + $0x10] sm:$0xff]
  %v21 = vld [vmem:[%s0 + $0x18] sm:$0xff]
  %v22 = vld [vmem:[%s2] sm:$0xff]
  %v23 = vld [vmem:[%s2 + $0x8] sm:$0xff]
  %v24 = vld [vmem:[%s2 + $0x10] sm:$0x1f]
  %26 = vset.pattern.permute.xlu0 0
  %27 = vperm.xlu0 %26, %v22
  %v28 = vpop.permute.xlu0 %27
  %31 = vset.pattern.permute.xlu0 0
  %32 = vperm.xlu0 %31, %v23
  %v33 = vpop.permute.xlu0 %32
  %36 = vset.pattern.permute.xlu0 0
  %37 = vperm.xlu0 %36, %v24
  %v38 = vpop.permute.xlu0 %37
  %v43 = vunpack.c.l.b16 %v15
  %v44 = vunpack.c.l.b16 %v16
  %v45 = vunpack.c.l.b16 %v17
  %v46 = vpack.c.b16 %v44, %v43
  %v47 = vpack.c.b16 %v45, %v45
  %v52 = vunpack.c.l.b16 %v18
  %v53 = vunpack.c.h.b16 %v18
  %v54 = vunpack.c.l.b16 %v19
  %v55 = vunpack.c.h.b16 %v19
  %v56 = vunpack.c.l.b16 %v20
  %v57 = vunpack.c.h.b16 %v20
  %v58 = vunpack.c.l.b16 %v21
  %v59 = vunpack.c.h.b16 %v21
  %v60 = vpack.c.b16 %v56, %v52
  %v61 = vpack.c.b16 %v57, %v53
  %v62 = vpack.c.b16 %v58, %v54
  %v63 = vpack.c.b16 %v59, %v55
  %vm68 = vcmask 130048
  %v70 = vsel %vm68, %v46, 0
  %v73 = vsel %vm68, %v47, 0
  %75 = vmatprep.subr.bf16.mxu0 %v61
  %76 = vmatpush1.bf16.msra.mxu0 %v60
  %77 = vmatprep.subr.bf16.mxu0 0
  %78 = vmatpush1.bf16.msra.mxu0 0
  %79 = vmatprep.subr.bf16.mxu0 0
  %80 = vmatpush1.bf16.msra.mxu0 0
  %81 = vmatprep.subr.bf16.mxu0 0
  %82 = vmatpush1.bf16.msra.mxu0 0
  %83 = vmatprep.subr.bf16.mxu0 0
  %84 = vmatpush1.bf16.msra.mxu0 0
  %85 = vmatprep.subr.bf16.mxu0 0
  %86 = vmatpush1.bf16.msra.mxu0 0
  %87 = vmatprep.subr.bf16.mxu0 0
  %88 = vmatpush1.bf16.msra.mxu0 0
  %89 = vmatprep.subr.bf16.mxu0 0
  %90 = vmatpush1.bf16.msra.mxu0 0
  %91 = vmatprep.subr.bf16.mxu0 0
  %92 = vmatpush1.bf16.msra.mxu0 0
  %93 = vmatprep.subr.bf16.mxu0 0
  %94 = vmatpush1.bf16.msra.mxu0 0
  %95 = vmatprep.subr.bf16.mxu0 0
  %96 = vmatpush1.bf16.msra.mxu0 0
  %97 = vmatprep.subr.bf16.mxu0 0
  %98 = vmatpush1.bf16.msra.mxu0 0
  %99 = vmatprep.subr.bf16.mxu0 0
  %100 = vmatpush1.bf16.msra.mxu0 0
  %101 = vmatprep.subr.bf16.mxu0 0
  %102 = vmatpush1.bf16.msra.mxu0 0
  %103 = vmatprep.subr.bf16.mxu0 0
  %104 = vmatpush1.bf16.msra.mxu0 0
  %105 = vmatprep.subr.bf16.mxu0 0
  %106 = vmatpush1.bf16.msra.mxu0 0
  %107 = vmatprep.mubr.bf16.mxu0 0
  %108 = vmatmul.mubr.bf16.gmra.mrb[0].mxu0 %v70
  %v109 = vpop.f32.mrb[0].mxu0
  %v110 = vadd.f32 %v28, %v109
  %v111 = vpop.f32.mrb[0].mxu0
  %v112 = vadd.f32 %v28, %v111
  %v113 = vpop.f32.mrb[0].mxu0
  %v114 = vadd.f32 %v33, %v113
  %v115 = vpop.f32.mrb[0].mxu0
  %v116 = vadd.f32 %v33, %v115
  %117 = vmatprep.mubr.bf16.mxu0 0
  %118 = vmatmul.mubr.bf16.gmra.mrb[0].mxu0 %v73
  %v119 = vpop.f32.mrb[0].mxu0
  %v120 = vadd.f32 %v38, %v119
  %v121 = vpop.f32.mrb[0].mxu0
  %v122 = vadd.f32 %v38, %v121
  %v123 = vpop.f32.mrb[0].mxu0
  %v124 = vpop.f32.mrb[0].mxu0
  %125 = vdwg.mxu0
  %126 = vmatprep.subr.bf16.mxu0 %v63
  %127 = vmatpush1.bf16.msra.mxu0 %v62
  %128 = vmatprep.subr.bf16.mxu0 0
  %129 = vmatpush1.bf16.msra.mxu0 0
  %130 = vmatprep.subr.bf16.mxu0 0
  %131 = vmatpush1.bf16.msra.mxu0 0
  %132 = vmatprep.subr.bf16.mxu0 0
  %133 = vmatpush1.bf16.msra.mxu0 0
  %134 = vmatprep.subr.bf16.mxu0 0
  %135 = vmatpush1.bf16.msra.mxu0 0
  %136 = vmatprep.subr.bf16.mxu0 0
  %137 = vmatpush1.bf16.msra.mxu0 0
  %138 = vmatprep.subr.bf16.mxu0 0
  %139 = vmatpush1.bf16.msra.mxu0 0
  %140 = vmatprep.subr.bf16.mxu0 0
  %141 = vmatpush1.bf16.msra.mxu0 0
  %142 = vmatprep.subr.bf16.mxu0 0
  %143 = vmatpush1.bf16.msra.mxu0 0
  %144 = vmatprep.subr.bf16.mxu0 0
  %145 = vmatpush1.bf16.msra.mxu0 0
  %146 = vmatprep.subr.bf16.mxu0 0
  %147 = vmatpush1.bf16.msra.mxu0 0
  %148 = vmatprep.subr.bf16.mxu0 0
  %149 = vmatpush1.bf16.msra.mxu0 0
  %150 = vmatprep.subr.bf16.mxu0 0
  %151 = vmatpush1.bf16.msra.mxu0 0
  %152 = vmatprep.subr.bf16.mxu0 0
  %153 = vmatpush1.bf16.msra.mxu0 0
  %154 = vmatprep.subr.bf16.mxu0 0
  %155 = vmatpush1.bf16.msra.mxu0 0
  %156 = vmatprep.subr.bf16.mxu0 0
  %157 = vmatpush1.bf16.msra.mxu0 0
  %158 = vmatprep.mubr.bf16.mxu0 0
  %159 = vmatmul.mubr.bf16.gmra.mrb[0].mxu0 %v70
  %v160 = vpop.f32.mrb[0].mxu0
  %v161 = vadd.f32 %v28, %v160
  %v162 = vpop.f32.mrb[0].mxu0
  %v163 = vadd.f32 %v28, %v162
  %v164 = vpop.f32.mrb[0].mxu0
  %v165 = vadd.f32 %v33, %v164
  %v166 = vpop.f32.mrb[0].mxu0
  %v167 = vadd.f32 %v33, %v166
  %168 = vmatprep.mubr.bf16.mxu0 0
  %169 = vmatmul.mubr.bf16.gmra.mrb[0].mxu0 %v73
  %v170 = vpop.f32.mrb[0].mxu0
  %v171 = vadd.f32 %v38, %v170
  %v172 = vpop.f32.mrb[0].mxu0
  %v173 = vadd.f32 %v38, %v172
  %v174 = vpop.f32.mrb[0].mxu0
  %v175 = vpop.f32.mrb[0].mxu0
  %176 = vdwg.mxu0
  %177 = vst [vmem:[%s3] sm:$0xff] %v110
  %178 = vst [vmem:[%s3 + $0x8] sm:$0xff] %v112
  %179 = vst [vmem:[%s3 + $0x10] sm:$0xff] %v161
  %180 = vst [vmem:[%s3 + $0x18] sm:$0xff] %v163
  %181 = vst [vmem:[%s3 + $0x20] sm:$0xff] %v114
  %182 = vst [vmem:[%s3 + $0x28] sm:$0xff] %v116
  %183 = vst [vmem:[%s3 + $0x30] sm:$0xff] %v165
  %184 = vst [vmem:[%s3 + $0x38] sm:$0xff] %v167
  %185 = vst [vmem:[%s3 + $0x40] sm:$0x1f] %v120
  %186 = vst [vmem:[%s3 + $0x48] sm:$0x1f] %v122
  %187 = vst [vmem:[%s3 + $0x50] sm:$0x1f] %v171
  %188 = vst [vmem:[%s3 + $0x58] sm:$0x1f] %v173
  // Predicated region
  $region14: #{_forward.16} parent=0 // pred_check
    _
  $region15: #{_forward.16} parent=0 // pred_check_branch
    %190 = sbr.rel (0) target = $region17
  $region16: #{_forward.16} parent=0 // pred_region
    _
  $region17: #{_forward.16} parent=0 // pred_fallthru
    _
  // Predicated region
  $region18: #{_forward.16} parent=0 // pred_check
    _
  $region19: #{_forward.16} parent=0 // pred_check_branch
    %192 = sbr.rel (0) target = $region21
  $region20: #{_forward.16} parent=0 // pred_region
    _
  $region21: #{_forward.16} parent=0 // pred_fallthru
    _

// kernel: tile.26
$region0: #{tile.26}
  #allocation0 [shape = 's32[1]{0}', space=sflag, size = 0x4, scoped, tag = 'scoped memory for tile.26']
  %s0 = inlined_call_operand.vmem [shape: f32[3], index: 0, kind: input, shape index: {}]
  %s1 = inlined_call_operand.vmem [shape: f32[256,3], index: 1, kind: output, shape index: {}]
  // Predicated region
  $region2: #{tile.26} parent=0 // pred_check
    _
  $region3: #{tile.26} parent=0 // pred_check_branch
    %3 = sbr.rel (0) target = $region5
  $region4: #{tile.26} parent=0 // pred_region
    _
  $region5: #{tile.26} parent=0 // pred_fallthru
    _
  %v4 = vld [vmem:[%s0] ss:$0 sm:$0xff]
  %5 = vst [vmem:[%s1] sm:$0xff] %v4
  %s6 = scalar_lea.vmem %s1, 8
  %7 = vst [vmem:[%s6] sm:$0xff] %v4
  %s8 = scalar_lea.vmem %s1, 16
  %9 = vst [vmem:[%s8] sm:$0xff] %v4
  %s10 = scalar_lea.vmem %s1, 24
  %11 = vst [vmem:[%s10] sm:$0xff] %v4
  %s12 = scalar_lea.vmem %s1, 32
  %13 = vst [vmem:[%s12] sm:$0xff] %v4
  %s14 = scalar_lea.vmem %s1, 40
  %15 = vst [vmem:[%s14] sm:$0xff] %v4
  %s16 = scalar_lea.vmem %s1, 48
  %17 = vst [vmem:[%s16] sm:$0xff] %v4
  %s18 = scalar_lea.vmem %s1, 56
  %19 = vst [vmem:[%s18] sm:$0xff] %v4
  %s20 = scalar_lea.vmem %s1, 64
  %21 = vst [vmem:[%s20] sm:$0xff] %v4
  %s22 = scalar_lea.vmem %s1, 72
  %23 = vst [vmem:[%s22] sm:$0xff] %v4
  %s24 = scalar_lea.vmem %s1, 80
  %25 = vst [vmem:[%s24] sm:$0xff] %v4
  %s26 = scalar_lea.vmem %s1, 88
  %27 = vst [vmem:[%s26] sm:$0xff] %v4
  %s28 = scalar_lea.vmem %s1, 96
  %29 = vst [vmem:[%s28] sm:$0xff] %v4
  %s30 = scalar_lea.vmem %s1, 104
  %31 = vst [vmem:[%s30] sm:$0xff] %v4
  %s32 = scalar_lea.vmem %s1, 112
  %33 = vst [vmem:[%s32] sm:$0xff] %v4
  %s34 = scalar_lea.vmem %s1, 120
  %35 = vst [vmem:[%s34] sm:$0xff] %v4
  %s36 = scalar_lea.vmem %s1, 128
  %37 = vst [vmem:[%s36] sm:$0xff] %v4
  %s38 = scalar_lea.vmem %s1, 136
  %39 = vst [vmem:[%s38] sm:$0xff] %v4
  %s40 = scalar_lea.vmem %s1, 144
  %41 = vst [vmem:[%s40] sm:$0xff] %v4
  %s42 = scalar_lea.vmem %s1, 152
  %43 = vst [vmem:[%s42] sm:$0xff] %v4
  %s44 = scalar_lea.vmem %s1, 160
  %45 = vst [vmem:[%s44] sm:$0xff] %v4
  %s46 = scalar_lea.vmem %s1, 168
  %47 = vst [vmem:[%s46] sm:$0xff] %v4
  %s48 = scalar_lea.vmem %s1, 176
  %49 = vst [vmem:[%s48] sm:$0xff] %v4
  %s50 = scalar_lea.vmem %s1, 184
  %51 = vst [vmem:[%s50] sm:$0xff] %v4
  %s52 = scalar_lea.vmem %s1, 192
  %53 = vst [vmem:[%s52] sm:$0xff] %v4
  %s54 = scalar_lea.vmem %s1, 200
  %55 = vst [vmem:[%s54] sm:$0xff] %v4
  %s56 = scalar_lea.vmem %s1, 208
  %57 = vst [vmem:[%s56] sm:$0xff] %v4
  %s58 = scalar_lea.vmem %s1, 216
  %59 = vst [vmem:[%s58] sm:$0xff] %v4
  %s60 = scalar_lea.vmem %s1, 224
  %61 = vst [vmem:[%s60] sm:$0xff] %v4
  %s62 = scalar_lea.vmem %s1, 232
  %63 = vst [vmem:[%s62] sm:$0xff] %v4
  %s64 = scalar_lea.vmem %s1, 240
  %65 = vst [vmem:[%s64] sm:$0xff] %v4
  %s66 = scalar_lea.vmem %s1, 248
  %67 = vst [vmem:[%s66] sm:$0xff] %v4

// kernel: _forward.17
$region0: #{_forward.17}
  #allocation0 [shape = 'u32[]', space=smem, size = 0x4, offset = 0x4, fixed_abs, tag = 'smem constant byte address 0x4 - core index']
  #allocation1 [shape = 'u32[144,128]{1,0:T(1,128)}', space=vmem, size = 0x12000, scoped, tag = 'internal scratch']
  %s0 = inlined_call_operand.vmem [shape: f32[2,7,768], index: 0, kind: input, shape index: {}]
  %s1 = inlined_call_operand.vmem [shape: f32[7,768], index: 1, kind: input, shape index: {}]
  %s2 = inlined_call_operand.vmem [shape: f32[7,768], index: 2, kind: input, shape index: {}]
  %s3 = inlined_call_operand.vmem [shape: f32[2,7,768], index: 3, kind: output, shape index: {}]
  %s4 = sld [smem:[#allocation0]]
  $region22: #{_forward.17} parent=0
    _
  %s6 = ssub.s32 1, %s4
  %s7 = scalar_select 0, %s6, %s4
  // Predicated region
  $region2: #{_forward.17} parent=0 // pred_check
    _
  $region3: #{_forward.17} parent=0 // pred_check_branch
    %9 = sbr.rel (0) target = $region5
  $region4: #{_forward.17} parent=0 // pred_region
    _
  $region5: #{_forward.17} parent=0 // pred_fallthru
    _
  // Predicated region
  $region6: #{_forward.17} parent=0 // pred_check
    _
  $region7: #{_forward.17} parent=0 // pred_check_branch
    %11 = sbr.rel (0) target = $region9
  $region8: #{_forward.17} parent=0 // pred_region
    _
  $region9: #{_forward.17} parent=0 // pred_fallthru
    _
  // Predicated region
  $region10: #{_forward.17} parent=0 // pred_check
    _
  $region11: #{_forward.17} parent=0 // pred_check_branch
    %13 = sbr.rel (0) target = $region13
  $region12: #{_forward.17} parent=0 // pred_region
    _
  $region13: #{_forward.17} parent=0 // pred_fallthru
    _
  %v14 = vld [vmem:[%s0] sm:$0x7f]
  %v15 = vld [vmem:[%s0 + $0x8] sm:$0x7f]
  %v16 = vld [vmem:[%s0 + $0x10] sm:$0x7f]
  %v17 = vld [vmem:[%s0 + $0x18] sm:$0x7f]
  %v18 = vld [vmem:[%s0 + $0x20] sm:$0x7f]
  %v19 = vld [vmem:[%s0 + $0x28] sm:$0x7f]
  %v20 = vld [vmem:[%s0 + $0x30] sm:$0x7f]
  %v21 = vld [vmem:[%s0 + $0x38] sm:$0x7f]
  %v22 = vld [vmem:[%s0 + $0x40] sm:$0x7f]
  %v23 = vld [vmem:[%s0 + $0x48] sm:$0x7f]
  %v24 = vld [vmem:[%s0 + $0x50] sm:$0x7f]
  %v25 = vld [vmem:[%s0 + $0x58] sm:$0x7f]
  %v26 = vlaneseq
  %v27 = vshrl.u32 %v26, 7
  %v28 = vsub.f32 0.0, %v14
  %v29 = vsub.f32 0.0, %v15
  %v30 = vsub.f32 0.0, %v16
  %v31 = vsub.f32 0.0, %v17
  %v32 = vsub.f32 0.0, %v18
  %v33 = vsub.f32 0.0, %v19
  %v34 = vsub.f32 0.0, %v20
  %v35 = vsub.f32 0.0, %v21
  %v36 = vsub.f32 0.0, %v22
  %v37 = vsub.f32 0.0, %v23
  %v38 = vsub.f32 0.0, %v24
  %v39 = vsub.f32 0.0, %v25
  %v40 = vmul.f32 %v28, 1.442695
  %v41 = vpow.pop %v40
  %v42 = vmul.f32 %v29, 1.442695
  %v43 = vpow.pop %v42
  %v44 = vmul.f32 %v30, 1.442695
  %v45 = vpow.pop %v44
  %v46 = vmul.f32 %v31, 1.442695
  %v47 = vpow.pop %v46
  %v48 = vmul.f32 %v32, 1.442695
  %v49 = vpow.pop %v48
  %v50 = vmul.f32 %v33, 1.442695
  %v51 = vpow.pop %v50
  %v52 = vmul.f32 %v34, 1.442695
  %v53 = vpow.pop %v52
  %v54 = vmul.f32 %v35, 1.442695
  %v55 = vpow.pop %v54
  %v56 = vmul.f32 %v36, 1.442695
  %v57 = vpow.pop %v56
  %v58 = vmul.f32 %v37, 1.442695
  %v59 = vpow.pop %v58
  %v60 = vmul.f32 %v38, 1.442695
  %v61 = vpow.pop %v60
  %v62 = vmul.f32 %v39, 1.442695
  %v63 = vpow.pop %v62
  %v64 = vadd.f32 %v41, 1.0
  %v65 = vadd.f32 %v43, 1.0
  %v66 = vadd.f32 %v45, 1.0
  %v67 = vadd.f32 %v47, 1.0
  %v68 = vadd.f32 %v49, 1.0
  %v69 = vadd.f32 %v51, 1.0
  %v70 = vadd.f32 %v53, 1.0
  %v71 = vadd.f32 %v55, 1.0
  %v72 = vadd.f32 %v57, 1.0
  %v73 = vadd.f32 %v59, 1.0
  %v74 = vadd.f32 %v61, 1.0
  %v75 = vadd.f32 %v63, 1.0
  %v76 = vrcp.pop %v64
  %v77 = vmul.f32 1.0, %v76
  %v78 = vrcp.pop %v65
  %v79 = vmul.f32 1.0, %v78
  %v80 = vrcp.pop %v66
  %v81 = vmul.f32 1.0, %v80
  %v82 = vrcp.pop %v67
  %v83 = vmul.f32 1.0, %v82
  %v84 = vrcp.pop %v68
  %v85 = vmul.f32 1.0, %v84
  %v86 = vrcp.pop %v69
  %v87 = vmul.f32 1.0, %v86
  %v88 = vrcp.pop %v70
  %v89 = vmul.f32 1.0, %v88
  %v90 = vrcp.pop %v71
  %v91 = vmul.f32 1.0, %v90
  %v92 = vrcp.pop %v72
  %v93 = vmul.f32 1.0, %v92
  %v94 = vrcp.pop %v73
  %v95 = vmul.f32 1.0, %v94
  %v96 = vrcp.pop %v74
  %v97 = vmul.f32 1.0, %v96
  %v98 = vrcp.pop %v75
  %v99 = vmul.f32 1.0, %v98
  %vm100 = vcmp.ge.s32.totalorder %v27, 2
  %vm101 = vcmp.lt.s32.totalorder %v27, 4
  %vm102 = vmand %vm100, %vm101
  %v103 = vld [vmem:[%s1] sm:$0x7f]
  %v104 = vld [vmem:[%s1 + $0x8] sm:$0x7f]
  %v105 = vld [vmem:[%s1 + $0x10] sm:$0x7f]
  %v106 = vld [vmem:[%s1 + $0x18] sm:$0x7f]
  %v107 = vld [vmem:[%s1 + $0x20] sm:$0x7f]
  %v108 = vld [vmem:[%s1 + $0x28] sm:$0x7f]
  %v109 = vadd.f32 %v77, %v103
  %v110 = vadd.f32 %v79, %v104
  %v111 = vadd.f32 %v81, %v105
  %v112 = vadd.f32 %v83, %v106
  %v113 = vadd.f32 %v85, %v107
  %v114 = vadd.f32 %v87, %v108
  %v115 = vadd.f32 %v89, %v103
  %v116 = vadd.f32 %v91, %v104
  %v117 = vadd.f32 %v93, %v105
  %v118 = vadd.f32 %v95, %v106
  %v119 = vadd.f32 %v97, %v107
  %v120 = vadd.f32 %v99, %v108
  %v121 = vsel %vm102, %v14, 0.0
  %v122 = vsel %vm102, %v15, 0.0
  %v123 = vsel %vm102, %v16, 0.0
  %v124 = vsel %vm102, %v17, 0.0
  %v125 = vsel %vm102, %v18, 0.0
  %v126 = vsel %vm102, %v19, 0.0
  %v127 = vsel %vm102, %v20, 0.0
  %v128 = vsel %vm102, %v21, 0.0
  %v129 = vsel %vm102, %v22, 0.0
  %v130 = vsel %vm102, %v23, 0.0
  %v131 = vsel %vm102, %v24, 0.0
  %v132 = vsel %vm102, %v25, 0.0
  %v133 = vmul.f32 %v121, 1.442695
  %v134 = vpow.pop %v133
  %v135 = vmul.f32 %v122, 1.442695
  %v136 = vpow.pop %v135
  %v137 = vmul.f32 %v123, 1.442695
  %v138 = vpow.pop %v137
  %v139 = vmul.f32 %v124, 1.442695
  %v140 = vpow.pop %v139
  %v141 = vmul.f32 %v125, 1.442695
  %v142 = vpow.pop %v141
  %v143 = vmul.f32 %v126, 1.442695
  %v144 = vpow.pop %v143
  %v145 = vmul.f32 %v127, 1.442695
  %v146 = vpow.pop %v145
  %v147 = vmul.f32 %v128, 1.442695
  %v148 = vpow.pop %v147
  %v149 = vmul.f32 %v129, 1.442695
  %v150 = vpow.pop %v149
  %v151 = vmul.f32 %v130, 1.442695
  %v152 = vpow.pop %v151
  %v153 = vmul.f32 %v131, 1.442695
  %v154 = vpow.pop %v153
  %v155 = vmul.f32 %v132, 1.442695
  %v156 = vpow.pop %v155
  %v157 = vld [vmem:[%s2] sm:$0x7f]
  %v158 = vld [vmem:[%s2 + $0x8] sm:$0x7f]
  %v159 = vld [vmem:[%s2 + $0x10] sm:$0x7f]
  %v160 = vld [vmem:[%s2 + $0x18] sm:$0x7f]
  %v161 = vld [vmem:[%s2 + $0x20] sm:$0x7f]
  %v162 = vld [vmem:[%s2 + $0x28] sm:$0x7f]
  %v163 = vmul.f32 %v134, %v157
  %v164 = vmul.f32 %v136, %v158
  %v165 = vmul.f32 %v138, %v159
  %v166 = vmul.f32 %v140, %v160
  %v167 = vmul.f32 %v142, %v161
  %v168 = vmul.f32 %v144, %v162
  %v169 = vmul.f32 %v146, %v157
  %v170 = vmul.f32 %v148, %v158
  %v171 = vmul.f32 %v150, %v159
  %v172 = vmul.f32 %v152, %v160
  %v173 = vmul.f32 %v154, %v161
  %v174 = vmul.f32 %v156, %v162
  %vm175 = vcmp.lt.s32.totalorder %v27, 2
  %v176 = vsel %vm102, %v163, %v77
  %v177 = vsel %vm102, %v164, %v79
  %v178 = vsel %vm102, %v165, %v81
  %v179 = vsel %vm102, %v166, %v83
  %v180 = vsel %vm102, %v167, %v85
  %v181 = vsel %vm102, %v168, %v87
  %v182 = vsel %vm102, %v169, %v89
  %v183 = vsel %vm102, %v170, %v91
  %v184 = vsel %vm102, %v171, %v93
  %v185 = vsel %vm102, %v172, %v95
  %v186 = vsel %vm102, %v173, %v97
  %v187 = vsel %vm102, %v174, %v99
  %v188 = vsel %vm175, %v109, %v176
  %v189 = vsel %vm175, %v110, %v177
  %v190 = vsel %vm175, %v111, %v178
  %v191 = vsel %vm175, %v112, %v179
  %v192 = vsel %vm175, %v113, %v180
  %v193 = vsel %vm175, %v114, %v181
  %v194 = vsel %vm175, %v115, %v182
  %v195 = vsel %vm175, %v116, %v183
  %v196 = vsel %vm175, %v117, %v184
  %v197 = vsel %vm175, %v118, %v185
  %v198 = vsel %vm175, %v119, %v186
  %v199 = vsel %vm175, %v120, %v187
  %200 = vst [vmem:[%s3] sm:$0x7f] %v188
  %201 = vst [vmem:[%s3 + $0x8] sm:$0x7f] %v189
  %202 = vst [vmem:[%s3 + $0x10] sm:$0x7f] %v190
  %203 = vst [vmem:[%s3 + $0x18] sm:$0x7f] %v191
  %204 = vst [vmem:[%s3 + $0x20] sm:$0x7f] %v192
  %205 = vst [vmem:[%s3 + $0x28] sm:$0x7f] %v193
  %206 = vst [vmem:[%s3 + $0x30] sm:$0x7f] %v194
  %207 = vst [vmem:[%s3 + $0x38] sm:$0x7f] %v195
  %208 = vst [vmem:[%s3 + $0x40] sm:$0x7f] %v196
  %209 = vst [vmem:[%s3 + $0x48] sm:$0x7f] %v197
  %210 = vst [vmem:[%s3 + $0x50] sm:$0x7f] %v198
  %211 = vst [vmem:[%s3 + $0x58] sm:$0x7f] %v199
  // Predicated region
  $region14: #{_forward.17} parent=0 // pred_check
    _
  $region15: #{_forward.17} parent=0 // pred_check_branch
    %213 = sbr.rel (0) target = $region17
  $region16: #{_forward.17} parent=0 // pred_region
    _
  $region17: #{_forward.17} parent=0 // pred_fallthru
    _
  // Predicated region
  $region18: #{_forward.17} parent=0 // pred_check
    _
  $region19: #{_forward.17} parent=0 // pred_check_branch
    %215 = sbr.rel (0) target = $region21
  $region20: #{_forward.17} parent=0 // pred_region
    _
  $region21: #{_forward.17} parent=0 // pred_fallthru
    _

// kernel: _forward.13
$region0: #{_forward.13}
  #allocation0 [shape = 'u32[]', space=smem, size = 0x4, offset = 0x4, fixed_abs, tag = 'smem constant byte address 0x4 - core index']
  #allocation1 [shape = 'u32[144,128]{1,0:T(1,128)}', space=vmem, size = 0x12000, scoped, tag = 'internal scratch']
  %s0 = inlined_call_operand.vmem [shape: bf16[16,128], index: 0, kind: input, shape index: {}]
  %s1 = inlined_call_operand.vmem [shape: bf16[21,16], index: 1, kind: input, shape index: {}]
  %s2 = inlined_call_operand.vmem [shape: f32[21,1], index: 2, kind: input, shape index: {}]
  %s3 = inlined_call_operand.vmem [shape: f32[21,128], index: 3, kind: output, shape index: {}]
  %s4 = sld [smem:[#allocation0]]
  $region22: #{_forward.13} parent=0
    _
  %s6 = ssub.s32 1, %s4
  %s7 = scalar_select 0, %s6, %s4
  // Predicated region
  $region2: #{_forward.13} parent=0 // pred_check
    _
  $region3: #{_forward.13} parent=0 // pred_check_branch
    %9 = sbr.rel (0) target = $region5
  $region4: #{_forward.13} parent=0 // pred_region
    _
  $region5: #{_forward.13} parent=0 // pred_fallthru
    _
  // Predicated region
  $region6: #{_forward.13} parent=0 // pred_check
    _
  $region7: #{_forward.13} parent=0 // pred_check_branch
    %11 = sbr.rel (0) target = $region9
  $region8: #{_forward.13} parent=0 // pred_region
    _
  $region9: #{_forward.13} parent=0 // pred_fallthru
    _
  // Predicated region
  $region10: #{_forward.13} parent=0 // pred_check
    _
  $region11: #{_forward.13} parent=0 // pred_check_branch
    %13 = sbr.rel (0) target = $region13
  $region12: #{_forward.13} parent=0 // pred_region
    _
  $region13: #{_forward.13} parent=0 // pred_fallthru
    _
  %v15 = vld [vmem:[%s1] sm:$0xf]
  %v16 = vld [vmem:[%s1 + $0x4] sm:$0xf]
  %v17 = vld [vmem:[%s1 + $0x8] sm:$0x7]
  %v18 = vld [vmem:[%s0] sm:$0xf]
  %v19 = vld [vmem:[%s0 + $0x4] sm:$0xf]
  %v20 = vld [vmem:[%s2] sm:$0xff]
  %v21 = vld [vmem:[%s2 + $0x8] sm:$0xff]
  %v22 = vld [vmem:[%s2 + $0x10] sm:$0x1f]
  %24 = vset.pattern.permute.xlu0 0
  %25 = vperm.xlu0 %24, %v20
  %v26 = vpop.permute.xlu0 %25
  %29 = vset.pattern.permute.xlu0 0
  %30 = vperm.xlu0 %29, %v21
  %v31 = vpop.permute.xlu0 %30
  %34 = vset.pattern.permute.xlu0 0
  %35 = vperm.xlu0 %34, %v22
  %v36 = vpop.permute.xlu0 %35
  %v41 = vunpack.c.l.b16 %v15
  %v42 = vunpack.c.l.b16 %v16
  %v43 = vunpack.c.l.b16 %v17
  %v44 = vpack.c.b16 %v42, %v41
  %v45 = vpack.c.b16 %v43, %v43
  %v48 = vunpack.c.l.b16 %v18
  %v49 = vunpack.c.l.b16 %v19
  %v50 = vpack.c.b16 %v49, %v48
  %vm52 = vcmask 130048
  %v54 = vsel %vm52, %v44, 0
  %v57 = vsel %vm52, %v45, 0
  %59 = vmatprep.subr.bf16.mxu0 0
  %60 = vmatpush1.bf16.msra.mxu0 %v50
  %61 = vmatprep.subr.bf16.mxu0 0
  %62 = vmatpush1.bf16.msra.mxu0 0
  %63 = vmatprep.subr.bf16.mxu0 0
  %64 = vmatpush1.bf16.msra.mxu0 0
  %65 = vmatprep.subr.bf16.mxu0 0
  %66 = vmatpush1.bf16.msra.mxu0 0
  %67 = vmatprep.subr.bf16.mxu0 0
  %68 = vmatpush1.bf16.msra.mxu0 0
  %69 = vmatprep.subr.bf16.mxu0 0
  %70 = vmatpush1.bf16.msra.mxu0 0
  %71 = vmatprep.subr.bf16.mxu0 0
  %72 = vmatpush1.bf16.msra.mxu0 0
  %73 = vmatprep.subr.bf16.mxu0 0
  %74 = vmatpush1.bf16.msra.mxu0 0
  %75 = vmatprep.subr.bf16.mxu0 0
  %76 = vmatpush1.bf16.msra.mxu0 0
  %77 = vmatprep.subr.bf16.mxu0 0
  %78 = vmatpush1.bf16.msra.mxu0 0
  %79 = vmatprep.subr.bf16.mxu0 0
  %80 = vmatpush1.bf16.msra.mxu0 0
  %81 = vmatprep.subr.bf16.mxu0 0
  %82 = vmatpush1.bf16.msra.mxu0 0
  %83 = vmatprep.subr.bf16.mxu0 0
  %84 = vmatpush1.bf16.msra.mxu0 0
  %85 = vmatprep.subr.bf16.mxu0 0
  %86 = vmatpush1.bf16.msra.mxu0 0
  %87 = vmatprep.subr.bf16.mxu0 0
  %88 = vmatpush1.bf16.msra.mxu0 0
  %89 = vmatprep.subr.bf16.mxu0 0
  %90 = vmatpush1.bf16.msra.mxu0 0
  %91 = vmatprep.mubr.bf16.mxu0 0
  %92 = vmatmul.mubr.bf16.gmra.mrb[0].mxu0 %v54
  %v93 = vpop.f32.mrb[0].mxu0
  %v94 = vadd.f32 %v26, %v93
  %v95 = vpop.f32.mrb[0].mxu0
  %v96 = vpop.f32.mrb[0].mxu0
  %v97 = vadd.f32 %v31, %v96
  %v98 = vpop.f32.mrb[0].mxu0
  %99 = vmatprep.mubr.bf16.mxu0 0
  %100 = vmatmul.mubr.bf16.gmra.mrb[0].mxu0 %v57
  %v101 = vpop.f32.mrb[0].mxu0
  %v102 = vadd.f32 %v36, %v101
  %v103 = vpop.f32.mrb[0].mxu0
  %v104 = vpop.f32.mrb[0].mxu0
  %v105 = vpop.f32.mrb[0].mxu0
  %106 = vdwg.mxu0
  %107 = vst [vmem:[%s3] sm:$0xff] %v94
  %108 = vst [vmem:[%s3 + $0x8] sm:$0xff] %v97
  %109 = vst [vmem:[%s3 + $0x10] sm:$0x1f] %v102
  // Predicated region
  $region14: #{_forward.13} parent=0 // pred_check
    _
  $region15: #{_forward.13} parent=0 // pred_check_branch
    %111 = sbr.rel (0) target = $region17
  $region16: #{_forward.13} parent=0 // pred_region
    _
  $region17: #{_forward.13} parent=0 // pred_fallthru
    _
  // Predicated region
  $region18: #{_forward.13} parent=0 // pred_check
    _
  $region19: #{_forward.13} parent=0 // pred_check_branch
    %113 = sbr.rel (0) target = $region21
  $region20: #{_forward.13} parent=0 // pred_region
    _
  $region21: #{_forward.13} parent=0 // pred_fallthru
    _

// kernel: tile.18
$region0: #{tile.18}
  #allocation0 [shape = 's32[1]{0}', space=sflag, size = 0x4, scoped, tag = 'scoped memory for tile.18']
  %s0 = inlined_call_operand.vmem [shape: f32[3], index: 0, kind: input, shape index: {}]
  %s1 = inlined_call_operand.vmem [shape: f32[64,3], index: 1, kind: output, shape index: {}]
  // Predicated region
  $region2: #{tile.18} parent=0 // pred_check
    _
  $region3: #{tile.18} parent=0 // pred_check_branch
    %3 = sbr.rel (0) target = $region5
  $region4: #{tile.18} parent=0 // pred_region
    _
  $region5: #{tile.18} parent=0 // pred_fallthru
    _
  %v4 = vld [vmem:[%s0] ss:$0 sm:$0xff]
  %5 = vst [vmem:[%s1] sm:$0xff] %v4
  %s6 = scalar_lea.vmem %s1, 8
  %7 = vst [vmem:[%s6] sm:$0xff] %v4
  %s8 = scalar_lea.vmem %s1, 16
  %9 = vst [vmem:[%s8] sm:$0xff] %v4
  %s10 = scalar_lea.vmem %s1, 24
  %11 = vst [vmem:[%s10] sm:$0xff] %v4
  %s12 = scalar_lea.vmem %s1, 32
  %13 = vst [vmem:[%s12] sm:$0xff] %v4
  %s14 = scalar_lea.vmem %s1, 40
  %15 = vst [vmem:[%s14] sm:$0xff] %v4
  %s16 = scalar_lea.vmem %s1, 48
  %17 = vst [vmem:[%s16] sm:$0xff] %v4
  %s18 = scalar_lea.vmem %s1, 56
  %19 = vst [vmem:[%s18] sm:$0xff] %v4

// kernel: _forward.14
$region0: #{_forward.14}
  #allocation0 [shape = 'u32[]', space=smem, size = 0x4, offset = 0x4, fixed_abs, tag = 'smem constant byte address 0x4 - core index']
  #allocation1 [shape = 'u32[144,128]{1,0:T(1,128)}', space=vmem, size = 0x12000, scoped, tag = 'internal scratch']
  %s0 = inlined_call_operand.vmem [shape: f32[2,7,192], index: 0, kind: input, shape index: {}]
  %s1 = inlined_call_operand.vmem [shape: f32[7,192], index: 1, kind: input, shape index: {}]
  %s2 = inlined_call_operand.vmem [shape: f32[7,192], index: 2, kind: input, shape index: {}]
  %s3 = inlined_call_operand.vmem [shape: f32[2,7,192], index: 3, kind: output, shape index: {}]
  %s4 = sld [smem:[#allocation0]]
  $region22: #{_forward.14} parent=0
    _
  %s6 = ssub.s32 1, %s4
  %s7 = scalar_select 0, %s6, %s4
  // Predicated region
  $region2: #{_forward.14} parent=0 // pred_check
    _
  $region3: #{_forward.14} parent=0 // pred_check_branch
    %9 = sbr.rel (0) target = $region5
  $region4: #{_forward.14} parent=0 // pred_region
    _
  $region5: #{_forward.14} parent=0 // pred_fallthru
    _
  // Predicated region
  $region6: #{_forward.14} parent=0 // pred_check
    _
  $region7: #{_forward.14} parent=0 // pred_check_branch
    %11 = sbr.rel (0) target = $region9
  $region8: #{_forward.14} parent=0 // pred_region
    _
  $region9: #{_forward.14} parent=0 // pred_fallthru
    _
  // Predicated region
  $region10: #{_forward.14} parent=0 // pred_check
    _
  $region11: #{_forward.14} parent=0 // pred_check_branch
    %13 = sbr.rel (0) target = $region13
  $region12: #{_forward.14} parent=0 // pred_region
    _
  $region13: #{_forward.14} parent=0 // pred_fallthru
    _
  %v14 = vld [vmem:[%s0] sm:$0x7f]
  %v15 = vld [vmem:[%s0 + $0x8] sm:$0x7f]
  %v16 = vld [vmem:[%s0 + $0x10] sm:$0x7f]
  %v17 = vld [vmem:[%s0 + $0x18] sm:$0x7f]
  %v18 = vlaneseq
  %v19 = vshrl.u32 %v18, 7
  %v20 = vsub.f32 0.0, %v14
  %v21 = vsub.f32 0.0, %v15
  %v22 = vsub.f32 0.0, %v16
  %v23 = vsub.f32 0.0, %v17
  %v24 = vmul.f32 %v20, 1.442695
  %v25 = vpow.pop %v24
  %v26 = vmul.f32 %v21, 1.442695
  %v27 = vpow.pop %v26
  %v28 = vmul.f32 %v22, 1.442695
  %v29 = vpow.pop %v28
  %v30 = vmul.f32 %v23, 1.442695
  %v31 = vpow.pop %v30
  %v32 = vadd.f32 %v25, 1.0
  %v33 = vadd.f32 %v27, 1.0
  %v34 = vadd.f32 %v29, 1.0
  %v35 = vadd.f32 %v31, 1.0
  %v36 = vrcp.pop %v32
  %v37 = vmul.f32 1.0, %v36
  %v38 = vrcp.pop %v33
  %v39 = vmul.f32 1.0, %v38
  %v40 = vrcp.pop %v34
  %v41 = vmul.f32 1.0, %v40
  %v42 = vrcp.pop %v35
  %v43 = vmul.f32 1.0, %v42
  %vm44 = vcmp.ge.s32.totalorder %v19, 2
  %vm45 = vcmp.lt.s32.totalorder %v19, 4
  %vm46 = vmand %vm44, %vm45
  %v47 = vld [vmem:[%s1] sm:$0x7f]
  %v48 = vld [vmem:[%s1 + $0x8] sm:$0x7f]
  %v49 = vadd.f32 %v37, %v47
  %v50 = vadd.f32 %v39, %v48
  %v51 = vadd.f32 %v41, %v47
  %v52 = vadd.f32 %v43, %v48
  %v53 = vmul.f32 %v49, 2.0
  %v54 = vmul.f32 %v50, 2.0
  %v55 = vmul.f32 %v51, 2.0
  %v56 = vmul.f32 %v52, 2.0
  %v57 = vsel %vm46, %v14, 0.0
  %v58 = vsel %vm46, %v15, 0.0
  %v59 = vsel %vm46, %v16, 0.0
  %v60 = vsel %vm46, %v17, 0.0
  %v61 = vmul.f32 %v57, 1.442695
  %v62 = vpow.pop %v61
  %v63 = vmul.f32 %v58, 1.442695
  %v64 = vpow.pop %v63
  %v65 = vmul.f32 %v59, 1.442695
  %v66 = vpow.pop %v65
  %v67 = vmul.f32 %v60, 1.442695
  %v68 = vpow.pop %v67
  %v69 = vld [vmem:[%s2] sm:$0x7f]
  %v70 = vld [vmem:[%s2 + $0x8] sm:$0x7f]
  %v71 = vmul.f32 %v62, %v69
  %v72 = vmul.f32 %v64, %v70
  %v73 = vmul.f32 %v66, %v69
  %v74 = vmul.f32 %v68, %v70
  %v75 = vmul.f32 %v71, 2.0
  %v76 = vmul.f32 %v72, 2.0
  %v77 = vmul.f32 %v73, 2.0
  %v78 = vmul.f32 %v74, 2.0
  %vm79 = vcmp.lt.s32.totalorder %v19, 2
  %v80 = vsel %vm46, %v75, %v37
  %v81 = vsel %vm46, %v76, %v39
  %v82 = vsel %vm46, %v77, %v41
  %v83 = vsel %vm46, %v78, %v43
  %v84 = vsel %vm79, %v53, %v80
  %v85 = vsel %vm79, %v54, %v81
  %v86 = vsel %vm79, %v55, %v82
  %v87 = vsel %vm79, %v56, %v83
  %88 = vst [vmem:[%s3] sm:$0x7f] %v84
  %vm89 = vcmask 522240
  %90 = vst.msk [vmem:[%s3 + $0x8] sm:$0x7f] %vm89, %v85
  %91 = vst [vmem:[%s3 + $0x10] sm:$0x7f] %v86
  %92 = vst.msk [vmem:[%s3 + $0x18] sm:$0x7f] %vm89, %v87
  // Predicated region
  $region14: #{_forward.14} parent=0 // pred_check
    _
  $region15: #{_forward.14} parent=0 // pred_check_branch
    %94 = sbr.rel (0) target = $region17
  $region16: #{_forward.14} parent=0 // pred_region
    _
  $region17: #{_forward.14} parent=0 // pred_fallthru
    _
  // Predicated region
  $region18: #{_forward.14} parent=0 // pred_check
    _
  $region19: #{_forward.14} parent=0 // pred_check_branch
    %96 = sbr.rel (0) target = $region21
  $region20: #{_forward.14} parent=0 // pred_region
    _
  $region21: #{_forward.14} parent=0 // pred_fallthru
    _

</llo_original>
